<compile_context>
chip_gen: v6e
topology: v6e:2x2x1
jax: 0.10.0
libtpu: 0.0.40
codegen_flags: <defaults>
</compile_context>

<pallas_src>
from functools import partial

import jax
import jax.numpy as jnp
from jax.experimental import pallas as pl
from jax.experimental.pallas import tpu as pltpu

EPS = 1e-5
NEG_INF = -1e30


def _rmsnorm(x, w, b, eps):
  var = jnp.mean(x * x, axis=-1, keepdims=True)
  return x * jax.lax.rsqrt(var + eps) * w + b


# ---------------------------------------------------------------------------
# Kernel 1: residual add + RMSNorm #1 + QKV projections (per sequence tile).
# ---------------------------------------------------------------------------
def _norm1_qkv_kernel(*refs, has_residual, eps, scale, matmul_dtype):
  if has_residual:
    (hs_ref, res_ref, w1_ref, b1_ref, wq_ref, wk_ref, wv_ref,
     q_ref, k_ref, v_ref, r_ref) = refs
  else:
    (hs_ref, w1_ref, b1_ref, wq_ref, wk_ref, wv_ref,
     q_ref, k_ref, v_ref, r_ref) = refs

  hs = hs_ref[0].astype(jnp.float32)                      # (TS, D)
  if has_residual:
    residual = hs + res_ref[0].astype(jnp.float32)
  else:
    residual = hs                                         # rms_norm_fn(residual=None)

  x = _rmsnorm(residual, w1_ref[0], b1_ref[0], eps)
  xm = x.astype(matmul_dtype)

  # 1/sqrt(head_dim) folded into Q (S x D multiply instead of S x S).
  q = jnp.dot(xm, wq_ref[...], preferred_element_type=jnp.float32) * scale
  k = jnp.dot(xm, wk_ref[...], preferred_element_type=jnp.float32)
  v = jnp.dot(xm, wv_ref[...], preferred_element_type=jnp.float32)

  q_ref[0] = q.astype(q_ref.dtype)
  k_ref[0] = k.astype(k_ref.dtype)
  v_ref[0] = v.astype(v_ref.dtype)
  r_ref[0] = residual.astype(r_ref.dtype)


# ---------------------------------------------------------------------------
# Kernel 2: causal flash attention, one (batch, head, q-tile) per output block,
#           online softmax over KV tiles (last grid axis).
# ---------------------------------------------------------------------------
def _flash_attn_kernel(q_ref, k_ref, v_ref, o_ref, m_sc, l_sc, acc_sc):
  qi = pl.program_id(2)
  ki = pl.program_id(3)

  @pl.when(ki == 0)
  def _init():
    m_sc[...] = jnp.full_like(m_sc, -jnp.inf)
    l_sc[...] = jnp.zeros_like(l_sc)
    acc_sc[...] = jnp.zeros_like(acc_sc)

  def _update(masked):
    q2 = q_ref[0]                                         # (TQ, hd), pre-scaled
    k2 = k_ref[0]                                         # (TK, hd)
    v2 = v_ref[0]                                         # (TK, hd)
    # QK^T without materializing a transpose: contract the last dims directly.
    s = jax.lax.dot_general(q2, k2, (((1,), (1,)), ((), ())),
                            preferred_element_type=jnp.float32)   # (TQ, TK)
    if masked:
      # Diagonal tile (TQ == TK, same start offset): local causal mask.
      row = jax.lax.broadcasted_iota(jnp.int32, s.shape, 0)
      col = jax.lax.broadcasted_iota(jnp.int32, s.shape, 1)
      s = jnp.where(col <= row, s, NEG_INF)
    m_prev = m_sc[...]
    m_new = jnp.maximum(m_prev, jnp.max(s, axis=-1, keepdims=True))
    alpha = jnp.exp(m_prev - m_new)
    p = jnp.exp(s - m_new)
    l_sc[...] = alpha * l_sc[...] + jnp.sum(p, axis=-1, keepdims=True)
    acc_sc[...] = alpha * acc_sc[...] + jnp.dot(
        p.astype(v2.dtype), v2, preferred_element_type=jnp.float32)
    m_sc[...] = m_new

  @pl.when(ki < qi)              # strictly below the diagonal: no mask needed
  def _below():
    _update(masked=False)

  @pl.when(ki == qi)             # diagonal tile: masked update, then finalize
  def _diag():                   # (last contributing KV tile for this Q tile)
    _update(masked=True)
    inv_l = pl.reciprocal(l_sc[...], approx=True)
    o_ref[0] = (acc_sc[...] * inv_l).astype(o_ref.dtype)
  # ki > qi: fully above the diagonal -> no compute, and the K/V index_map is
  # clamped to the diagonal block so no extra K/V DMA is issued either.


# ---------------------------------------------------------------------------
# Kernel 3: attention output projection + residual + RMSNorm #2 + gated MLP,
#           with the MLP inner dimension F tiled (last grid axis = reduction).
# ---------------------------------------------------------------------------
def _oproj_norm2_mlp_kernel(attn_ref, r1_ref, w2_ref, b2_ref, wo_ref,
                            wg_ref, wu_ref, wd_ref,
                            hs_out_ref, res_out_ref,
                            x2_sc, y_acc, *, eps, matmul_dtype):
  fi = pl.program_id(2)

  @pl.when(fi == 0)
  def _init():
    attn = attn_ref[0].astype(matmul_dtype)               # (TS, D)
    hs_mix = jnp.dot(attn, wo_ref[...], preferred_element_type=jnp.float32)
    residual2 = hs_mix + r1_ref[0].astype(jnp.float32)
    x2 = _rmsnorm(residual2, w2_ref[0], b2_ref[0], eps)
    res_out_ref[0] = residual2.astype(res_out_ref.dtype)
    x2_sc[...] = x2.astype(x2_sc.dtype)
    y_acc[...] = jnp.zeros_like(y_acc)

  x2 = x2_sc[...]                                          # (TS, D)
  g = jnp.dot(x2, wg_ref[...], preferred_element_type=jnp.float32)   # (TS, TF)
  u = jnp.dot(x2, wu_ref[...], preferred_element_type=jnp.float32)
  h_act = (jax.nn.silu(g) * u).astype(matmul_dtype)
  y_acc[...] += jnp.dot(h_act, wd_ref[...], preferred_element_type=jnp.float32)

  @pl.when(fi == pl.num_programs(2) - 1)
  def _finalize():
    hs_out_ref[0] = y_acc[...].astype(hs_out_ref.dtype)


# ---------------------------------------------------------------------------
# Wrapper
# ---------------------------------------------------------------------------
def encoder_layer(hidden_states, residual, params, *, num_heads, eps=EPS,
                  matmul_dtype=jnp.float32, residual_in_fp32=False,
                  seq_tile=128, f_tile=512):
  """hidden_states: (B,S,D); residual: (B,S,D) or None.  Returns (hs, residual)."""
  B, S, D = hidden_states.shape
  F = params["wg"].shape[1]
  assert D % num_heads == 0
  head_dim = D // num_heads
  assert head_dim % 128 == 0, "head_dim must be a multiple of 128 (lane width)"

  ts = min(seq_tile, S)
  assert S % ts == 0 and (ts % 8 == 0 or ts == S)
  tf = min(f_tile, F)
  assert F % tf == 0 and (tf % 128 == 0 or tf == F)
  nq = S // ts

  has_residual = residual is not None
  out_dtype = hidden_states.dtype
  res_dtype = jnp.float32 if residual_in_fp32 else hidden_states.dtype
  itm = jnp.dtype(matmul_dtype).itemsize
  ith = jnp.dtype(hidden_states.dtype).itemsize

  # Cast matmul weights once in the wrapper (bf16 halves weight DMA + 2x MXU rate).
  wq = params["wq"].astype(matmul_dtype)
  wk = params["wk"].astype(matmul_dtype)
  wv = params["wv"].astype(matmul_dtype)
  wo = params["wo"].astype(matmul_dtype)
  wg = params["wg"].astype(matmul_dtype)
  wu = params["wu"].astype(matmul_dtype)
  wd = params["wd"].astype(matmul_dtype)

  # -------------------- kernel 1: norm1 + QKV --------------------
  act1 = pl.BlockSpec((1, ts, D), lambda b, s: (b, s, 0))
  vec1 = pl.BlockSpec((1, D), lambda b, s: (0, 0))
  dd1 = pl.BlockSpec((D, D), lambda b, s: (0, 0))

  in1 = [hidden_states] + ([residual] if has_residual else []) + [
      params["norm1_w"], params["norm1_b"], wq, wk, wv]
  in1_specs = [act1] + ([act1] if has_residual else []) + [vec1, vec1, dd1, dd1, dd1]

  cost1 = pl.CostEstimate(
      flops=int(6 * B * S * D * D),
      transcendentals=int(B * S),
      bytes_accessed=int((1 + int(has_residual)) * B * S * D * ith
                         + 3 * D * D * itm + 3 * B * S * D * itm + B * S * D * 4))

  q, k, v, resid1 = pl.pallas_call(
      partial(_norm1_qkv_kernel, has_residual=has_residual, eps=eps,
              scale=1.0 / float(head_dim) ** 0.5, matmul_dtype=matmul_dtype),
      grid=(B, nq),
      in_specs=in1_specs,
      out_specs=[act1, act1, act1, act1],
      out_shape=[jax.ShapeDtypeStruct((B, S, D), matmul_dtype)] * 3
                + [jax.ShapeDtypeStruct((B, S, D), jnp.float32)],
      compiler_params=pltpu.CompilerParams(
          dimension_semantics=("parallel", "parallel")),
      cost_estimate=cost1,
  )(*in1)

  # -------------------- kernel 2: causal flash attention --------------------
  q_spec = pl.BlockSpec((1, ts, head_dim), lambda b, h, qi, ki: (b, qi, h))
  kv_spec = pl.BlockSpec((1, ts, head_dim),
                         lambda b, h, qi, ki: (b, jnp.minimum(ki, qi), h))
  o_spec = pl.BlockSpec((1, ts, head_dim), lambda b, h, qi, ki: (b, qi, h))

  cost2 = pl.CostEstimate(
      flops=int(2 * B * S * S * D),                  # causal ~half of 4*B*S*S*D
      transcendentals=int(B * num_heads * S * S // 2),
      bytes_accessed=int(4 * B * S * D * itm))

  attn = pl.pallas_call(
      _flash_attn_kernel,
      grid=(B, num_heads, nq, nq),
      in_specs=[q_spec, kv_spec, kv_spec],
      out_specs=o_spec,
      out_shape=jax.ShapeDtypeStruct((B, S, D), matmul_dtype),
      scratch_shapes=[pltpu.VMEM((ts, 1), jnp.float32),
                      pltpu.VMEM((ts, 1), jnp.float32),
                      pltpu.VMEM((ts, head_dim), jnp.float32)],
      compiler_params=pltpu.CompilerParams(
          dimension_semantics=("parallel", "parallel", "parallel", "arbitrary")),
      cost_estimate=cost2,
  )(q, k, v)

  # ---------------- kernel 3: out-proj + norm2 + gated MLP (F-tiled) -------
  act3 = pl.BlockSpec((1, ts, D), lambda b, s, f: (b, s, 0))
  vec3 = pl.BlockSpec((1, D), lambda b, s, f: (0, 0))
  dd3 = pl.BlockSpec((D, D), lambda b, s, f: (0, 0))
  df3 = pl.BlockSpec((D, tf), lambda b, s, f: (0, f))
  fd3 = pl.BlockSpec((tf, D), lambda b, s, f: (f, 0))

  cost3 = pl.CostEstimate(
      flops=int(2 * B * S * D * D + 6 * B * S * D * F),
      transcendentals=int(B * S * F + B * S),
      bytes_accessed=int(B * S * D * (itm + 4)
                         + (D * D + 3 * D * F) * itm
                         + B * S * D * (ith + jnp.dtype(res_dtype).itemsize)))

  out_hs, out_res = pl.pallas_call(
      partial(_oproj_norm2_mlp_kernel, eps=eps, matmul_dtype=matmul_dtype),
      grid=(B, nq, F // tf),
      in_specs=[act3, act3, vec3, vec3, dd3, df3, df3, fd3],
      out_specs=[act3, act3],
      out_shape=[jax.ShapeDtypeStruct((B, S, D), out_dtype),
                 jax.ShapeDtypeStruct((B, S, D), res_dtype)],
      scratch_shapes=[pltpu.VMEM((ts, D), matmul_dtype),
                      pltpu.VMEM((ts, D), jnp.float32)],
      compiler_params=pltpu.CompilerParams(
          dimension_semantics=("parallel", "parallel", "arbitrary")),
      cost_estimate=cost3,
  )(attn, resid1, params["norm2_w"], params["norm2_b"], wo, wg, wu, wd)

  return out_hs, out_res


# -------------------- pure-JAX reference (for sanity check) --------------------
def encoder_layer_ref(hs, res, params, *, num_heads, eps=EPS):
  if res is None:
    res = jnp.zeros_like(hs)
  B, S, D = hs.shape
  hd = D // num_heads
  residual = hs + res
  x = _rmsnorm(residual, params["norm1_w"][0], params["norm1_b"][0], eps)
  q = x @ params["wq"]
  k = x @ params["wk"]
  v = x @ params["wv"]
  q = q.reshape(B, S, num_heads, hd).transpose(0, 2, 1, 3)
  k = k.reshape(B, S, num_heads, hd).transpose(0, 2, 1, 3)
  v = v.reshape(B, S, num_heads, hd).transpose(0, 2, 1, 3)
  scores = jnp.einsum("bhqd,bhkd->bhqk", q, k) / jnp.sqrt(jnp.float32(hd))
  mask = jnp.tril(jnp.ones((S, S), bool))
  scores = jnp.where(mask, scores, NEG_INF)
  p = jax.nn.softmax(scores, axis=-1)
  attn = jnp.einsum("bhqk,bhkd->bhqd", p, v).transpose(0, 2, 1, 3).reshape(B, S, D)
  hs_mix = attn @ params["wo"]
  residual2 = hs_mix + residual
  x2 = _rmsnorm(residual2, params["norm2_w"][0], params["norm2_b"][0], eps)
  y = (jax.nn.silu(x2 @ params["wg"]) * (x2 @ params["wu"])) @ params["wd"]
  return y, residual2


def init_params(key, hidden_dim, mlp_inner_dim):
  ks = jax.random.split(key, 9)
  D, F = hidden_dim, mlp_inner_dim
  s = 0.05
  return {
      "norm1_w": 1.0 + 0.1 * jax.random.normal(ks[7], (1, D), jnp.float32),
      "norm1_b": jnp.zeros((1, D), jnp.float32),   # mamba RMSNorm bias is None -> zeros
      "norm2_w": 1.0 + 0.1 * jax.random.normal(ks[8], (1, D), jnp.float32),
      "norm2_b": jnp.zeros((1, D), jnp.float32),
      "wq": s * jax.random.normal(ks[0], (D, D), jnp.float32),
      "wk": s * jax.random.normal(ks[1], (D, D), jnp.float32),
      "wv": s * jax.random.normal(ks[2], (D, D), jnp.float32),
      "wo": s * jax.random.normal(ks[3], (D, D), jnp.float32),
      "wg": s * jax.random.normal(ks[4], (D, F), jnp.float32),
      "wu": s * jax.random.normal(ks[5], (D, F), jnp.float32),
      "wd": s * jax.random.normal(ks[6], (F, D), jnp.float32),
  }


if __name__ == "__main__":
  # Small but tiling-friendly shapes: 2 seq tiles, 2 heads (head_dim=128), 2 F tiles.
  B, S, D, H, F = 2, 256, 256, 2, 512
  key = jax.random.PRNGKey(0)
  k_hs, k_res, k_p = jax.random.split(key, 3)

  hidden_states = jax.random.normal(k_hs, (B, S, D), jnp.float32)
  residual = jax.random.normal(k_res, (B, S, D), jnp.float32)
  params = init_params(k_p, D, F)

  # f32 matmuls: strict check against the pure-JAX reference.
  out_hs, out_res = encoder_layer(hidden_states, residual, params,
                                  num_heads=H, seq_tile=128, f_tile=256)
  jax.block_until_ready((out_hs, out_res))
  ref_hs, ref_res = encoder_layer_ref(hidden_states, residual, params, num_heads=H)
  assert jnp.allclose(out_hs, ref_hs, atol=2e-2, rtol=2e-2), \
      float(jnp.max(jnp.abs(out_hs - ref_hs)))
  assert jnp.allclose(out_res, ref_res, atol=2e-2, rtol=2e-2), \
      float(jnp.max(jnp.abs(out_res - ref_res)))

  # residual=None path (first layer): no zeros-residual DMA.
  out_hs0, out_res0 = encoder_layer(hidden_states, None, params,
                                    num_heads=H, seq_tile=128, f_tile=256)
  ref_hs0, ref_res0 = encoder_layer_ref(hidden_states, None, params, num_heads=H)
  assert jnp.allclose(out_hs0, ref_hs0, atol=2e-2, rtol=2e-2)
  assert jnp.allclose(out_res0, ref_res0, atol=2e-2, rtol=2e-2)

  # bf16 matmul path (v6e/v7x MXU peak), f32 accumulation: smoke test, loose check.
  out_hs_bf, out_res_bf = encoder_layer(hidden_states, residual, params,
                                        num_heads=H, matmul_dtype=jnp.bfloat16,
                                        seq_tile=128, f_tile=256)
  jax.block_until_ready((out_hs_bf, out_res_bf))
  assert bool(jnp.all(jnp.isfinite(out_hs_bf.astype(jnp.float32))))
  assert float(jnp.max(jnp.abs(out_hs_bf.astype(jnp.float32) - ref_hs))) < 0.3

  print("KERNEL_OK")
</pallas_src>

<mosaic_0001>
module attributes {stable_mosaic.version = 11 : i64} {
  func.func @_norm1_qkv_kernel(%arg0: i32, %arg1: i32, %arg2: memref<1x128x256xf32, #tpu.memory_space<vmem>>, %arg3: memref<1x128x256xf32, #tpu.memory_space<vmem>>, %arg4: memref<1x256xf32, #tpu.memory_space<vmem>>, %arg5: memref<1x256xf32, #tpu.memory_space<vmem>>, %arg6: memref<256x256xf32, #tpu.memory_space<vmem>>, %arg7: memref<256x256xf32, #tpu.memory_space<vmem>>, %arg8: memref<256x256xf32, #tpu.memory_space<vmem>>, %arg9: memref<1x128x256xf32, #tpu.memory_space<vmem>>, %arg10: memref<1x128x256xf32, #tpu.memory_space<vmem>>, %arg11: memref<1x128x256xf32, #tpu.memory_space<vmem>>, %arg12: memref<1x128x256xf32, #tpu.memory_space<vmem>>) attributes {dimension_semantics = [#tpu.dimension_semantics<parallel>, #tpu.dimension_semantics<parallel>], iteration_bounds = array<i64: 2, 2>, scalar_prefetch = 0 : i64, scratch_operands = 0 : i64, tpu.core_type = #tpu.core_type<tc>, window_params = [{transform_indices = @transform_0, window_bounds = array<i64: 1, 128, 256>}, {transform_indices = @transform_1, window_bounds = array<i64: 1, 128, 256>}, {pipeline_mode = #tpu.pipeline_mode<synchronous>, transform_indices = @transform_2, window_bounds = array<i64: 1, 256>}, {pipeline_mode = #tpu.pipeline_mode<synchronous>, transform_indices = @transform_3, window_bounds = array<i64: 1, 256>}, {pipeline_mode = #tpu.pipeline_mode<synchronous>, transform_indices = @transform_4, window_bounds = array<i64: 256, 256>}, {pipeline_mode = #tpu.pipeline_mode<synchronous>, transform_indices = @transform_5, window_bounds = array<i64: 256, 256>}, {pipeline_mode = #tpu.pipeline_mode<synchronous>, transform_indices = @transform_6, window_bounds = array<i64: 256, 256>}, {transform_indices = @transform_7, window_bounds = array<i64: 1, 128, 256>}, {transform_indices = @transform_8, window_bounds = array<i64: 1, 128, 256>}, {transform_indices = @transform_9, window_bounds = array<i64: 1, 128, 256>}, {transform_indices = @transform_10, window_bounds = array<i64: 1, 128, 256>}]} {
    %c0 = arith.constant 0 : index
    %c0_0 = arith.constant 0 : index
    %c0_1 = arith.constant 0 : index
    %0 = vector.load %arg2[%c0, %c0_0, %c0_1] : memref<1x128x256xf32, #tpu.memory_space<vmem>>, vector<1x128x256xf32>
    %1 = vector.shape_cast %0 : vector<1x128x256xf32> to vector<128x256xf32>
    %c0_2 = arith.constant 0 : index
    %c0_3 = arith.constant 0 : index
    %c0_4 = arith.constant 0 : index
    %2 = vector.load %arg3[%c0_2, %c0_3, %c0_4] : memref<1x128x256xf32, #tpu.memory_space<vmem>>, vector<1x128x256xf32>
    %3 = vector.shape_cast %2 : vector<1x128x256xf32> to vector<128x256xf32>
    %4 = arith.addf %1, %3 : vector<128x256xf32>
    %c0_5 = arith.constant 0 : index
    %c0_6 = arith.constant 0 : index
    %5 = vector.load %arg4[%c0_5, %c0_6] : memref<1x256xf32, #tpu.memory_space<vmem>>, vector<1x256xf32>
    %6 = vector.shape_cast %5 : vector<1x256xf32> to vector<256xf32>
    %c0_7 = arith.constant 0 : index
    %c0_8 = arith.constant 0 : index
    %7 = vector.load %arg5[%c0_7, %c0_8] : memref<1x256xf32, #tpu.memory_space<vmem>>, vector<1x256xf32>
    %8 = vector.shape_cast %7 : vector<1x256xf32> to vector<256xf32>
    %9 = arith.mulf %4, %4 : vector<128x256xf32>
    %cst = arith.constant dense<0.000000e+00> : vector<128xf32>
    %10 = vector.multi_reduction <add>, %9, %cst [1] : vector<128x256xf32> to vector<128xf32>
    %11 = vector.shape_cast %10 : vector<128xf32> to vector<128x1xf32>
    %cst_9 = arith.constant 2.560000e+02 : f32
    %12 = vector.broadcast %cst_9 : f32 to vector<128x1xf32>
    %13 = arith.divf %11, %12 : vector<128x1xf32>
    %cst_10 = arith.constant 9.99999974E-6 : f32
    %14 = vector.broadcast %cst_10 : f32 to vector<128x1xf32>
    %15 = arith.addf %13, %14 : vector<128x1xf32>
    %16 = math.rsqrt %15 : vector<128x1xf32>
    %17 = vector.broadcast %16 : vector<128x1xf32> to vector<128x256xf32>
    %18 = arith.mulf %4, %17 : vector<128x256xf32>
    %19 = vector.shape_cast %6 : vector<256xf32> to vector<1x256xf32>
    %20 = vector.broadcast %19 : vector<1x256xf32> to vector<128x256xf32>
    %21 = arith.mulf %18, %20 : vector<128x256xf32>
    %22 = vector.shape_cast %8 : vector<256xf32> to vector<1x256xf32>
    %23 = vector.broadcast %22 : vector<1x256xf32> to vector<128x256xf32>
    %24 = arith.addf %21, %23 : vector<128x256xf32>
    %c0_11 = arith.constant 0 : index
    %c0_12 = arith.constant 0 : index
    %25 = vector.load %arg6[%c0_11, %c0_12] : memref<256x256xf32, #tpu.memory_space<vmem>>, vector<256x256xf32>
    %cst_13 = arith.constant dense<0.000000e+00> : vector<128x256xf32>
    %26 = tpu.matmul %24, %25, %cst_13 {dimension_numbers = #tpu.dot_dimension_numbers<[1], [0], [0], [1], [0, 0, 1, 1], [], []>} : vector<128x256xf32>, vector<256x256xf32>, vector<128x256xf32> -> vector<128x256xf32>
    %cst_14 = arith.constant 0.0883883461 : f32
    %27 = vector.broadcast %cst_14 : f32 to vector<128x256xf32>
    %28 = arith.mulf %26, %27 : vector<128x256xf32>
    %c0_15 = arith.constant 0 : index
    %c0_16 = arith.constant 0 : index
    %29 = vector.load %arg7[%c0_15, %c0_16] : memref<256x256xf32, #tpu.memory_space<vmem>>, vector<256x256xf32>
    %cst_17 = arith.constant dense<0.000000e+00> : vector<128x256xf32>
    %30 = tpu.matmul %24, %29, %cst_17 {dimension_numbers = #tpu.dot_dimension_numbers<[1], [0], [0], [1], [0, 0, 1, 1], [], []>} : vector<128x256xf32>, vector<256x256xf32>, vector<128x256xf32> -> vector<128x256xf32>
    %c0_18 = arith.constant 0 : index
    %c0_19 = arith.constant 0 : index
    %31 = vector.load %arg8[%c0_18, %c0_19] : memref<256x256xf32, #tpu.memory_space<vmem>>, vector<256x256xf32>
    %cst_20 = arith.constant dense<0.000000e+00> : vector<128x256xf32>
    %32 = tpu.matmul %24, %31, %cst_20 {dimension_numbers = #tpu.dot_dimension_numbers<[1], [0], [0], [1], [0, 0, 1, 1], [], []>} : vector<128x256xf32>, vector<256x256xf32>, vector<128x256xf32> -> vector<128x256xf32>
    %c0_21 = arith.constant 0 : index
    %c0_22 = arith.constant 0 : index
    %c0_23 = arith.constant 0 : index
    %33 = vector.load %arg9[%c0_21, %c0_22, %c0_23] : memref<1x128x256xf32, #tpu.memory_space<vmem>>, vector<1x128x256xf32>
    %34 = vector.shape_cast %33 : vector<1x128x256xf32> to vector<128x256xf32>
    %35 = vector.shape_cast %28 : vector<128x256xf32> to vector<1x128x256xf32>
    tpu.vector_store %arg9[%c0_21, %c0_22, %c0_23], %35 {strides = array<i32>} : memref<1x128x256xf32, #tpu.memory_space<vmem>>, vector<1x128x256xf32>,
    %c0_24 = arith.constant 0 : index
    %c0_25 = arith.constant 0 : index
    %c0_26 = arith.constant 0 : index
    %36 = vector.load %arg10[%c0_24, %c0_25, %c0_26] : memref<1x128x256xf32, #tpu.memory_space<vmem>>, vector<1x128x256xf32>
    %37 = vector.shape_cast %36 : vector<1x128x256xf32> to vector<128x256xf32>
    %38 = vector.shape_cast %30 : vector<128x256xf32> to vector<1x128x256xf32>
    tpu.vector_store %arg10[%c0_24, %c0_25, %c0_26], %38 {strides = array<i32>} : memref<1x128x256xf32, #tpu.memory_space<vmem>>, vector<1x128x256xf32>,
    %c0_27 = arith.constant 0 : index
    %c0_28 = arith.constant 0 : index
    %c0_29 = arith.constant 0 : index
    %39 = vector.load %arg11[%c0_27, %c0_28, %c0_29] : memref<1x128x256xf32, #tpu.memory_space<vmem>>, vector<1x128x256xf32>
    %40 = vector.shape_cast %39 : vector<1x128x256xf32> to vector<128x256xf32>
    %41 = vector.shape_cast %32 : vector<128x256xf32> to vector<1x128x256xf32>
    tpu.vector_store %arg11[%c0_27, %c0_28, %c0_29], %41 {strides = array<i32>} : memref<1x128x256xf32, #tpu.memory_space<vmem>>, vector<1x128x256xf32>,
    %c0_30 = arith.constant 0 : index
    %c0_31 = arith.constant 0 : index
    %c0_32 = arith.constant 0 : index
    %42 = vector.load %arg12[%c0_30, %c0_31, %c0_32] : memref<1x128x256xf32, #tpu.memory_space<vmem>>, vector<1x128x256xf32>
    %43 = vector.shape_cast %42 : vector<1x128x256xf32> to vector<128x256xf32>
    %44 = vector.shape_cast %4 : vector<128x256xf32> to vector<1x128x256xf32>
    tpu.vector_store %arg12[%c0_30, %c0_31, %c0_32], %44 {strides = array<i32>} : memref<1x128x256xf32, #tpu.memory_space<vmem>>, vector<1x128x256xf32>,
    return
  }
  func.func @transform_0(%arg0: i32, %arg1: i32) -> (i32, i32, i32) {
    %c0_i32 = arith.constant 0 : i32
    %c0_i32_0 = arith.constant 0 : i32
    return %arg0, %arg1, %c0_i32 : i32, i32, i32
  }
  func.func @transform_1(%arg0: i32, %arg1: i32) -> (i32, i32, i32) {
    %c0_i32 = arith.constant 0 : i32
    %c0_i32_0 = arith.constant 0 : i32
    return %arg0, %arg1, %c0_i32 : i32, i32, i32
  }
  func.func @transform_2(%arg0: i32, %arg1: i32) -> (i32, i32) {
    %c0_i32 = arith.constant 0 : i32
    %c0_i32_0 = arith.constant 0 : i32
    %c0_i32_1 = arith.constant 0 : i32
    return %c0_i32, %c0_i32_0 : i32, i32
  }
  func.func @transform_3(%arg0: i32, %arg1: i32) -> (i32, i32) {
    %c0_i32 = arith.constant 0 : i32
    %c0_i32_0 = arith.constant 0 : i32
    %c0_i32_1 = arith.constant 0 : i32
    return %c0_i32, %c0_i32_0 : i32, i32
  }
  func.func @transform_4(%arg0: i32, %arg1: i32) -> (i32, i32) {
    %c0_i32 = arith.constant 0 : i32
    %c0_i32_0 = arith.constant 0 : i32
    %c0_i32_1 = arith.constant 0 : i32
    return %c0_i32, %c0_i32_0 : i32, i32
  }
  func.func @transform_5(%arg0: i32, %arg1: i32) -> (i32, i32) {
    %c0_i32 = arith.constant 0 : i32
    %c0_i32_0 = arith.constant 0 : i32
    %c0_i32_1 = arith.constant 0 : i32
    return %c0_i32, %c0_i32_0 : i32, i32
  }
  func.func @transform_6(%arg0: i32, %arg1: i32) -> (i32, i32) {
    %c0_i32 = arith.constant 0 : i32
    %c0_i32_0 = arith.constant 0 : i32
    %c0_i32_1 = arith.constant 0 : i32
    return %c0_i32, %c0_i32_0 : i32, i32
  }
  func.func @transform_7(%arg0: i32, %arg1: i32) -> (i32, i32, i32) {
    %c0_i32 = arith.constant 0 : i32
    %c0_i32_0 = arith.constant 0 : i32
    return %arg0, %arg1, %c0_i32 : i32, i32, i32
  }
  func.func @transform_8(%arg0: i32, %arg1: i32) -> (i32, i32, i32) {
    %c0_i32 = arith.constant 0 : i32
    %c0_i32_0 = arith.constant 0 : i32
    return %arg0, %arg1, %c0_i32 : i32, i32, i32
  }
  func.func @transform_9(%arg0: i32, %arg1: i32) -> (i32, i32, i32) {
    %c0_i32 = arith.constant 0 : i32
    %c0_i32_0 = arith.constant 0 : i32
    return %arg0, %arg1, %c0_i32 : i32, i32, i32
  }
  func.func @transform_10(%arg0: i32, %arg1: i32) -> (i32, i32, i32) {
    %c0_i32 = arith.constant 0 : i32
    %c0_i32_0 = arith.constant 0 : i32
    return %arg0, %arg1, %c0_i32 : i32, i32, i32
  }
}

</mosaic_0001>

<llo_original>
// kernel: tpu_custom_call.1
$region0: #{tpu_custom_call.1}
  #allocation0 [shape = 'u32[]', space=smem, size = 0x4, offset = 0x4, fixed_abs, tag = 'smem constant byte address 0x4 - core index']
  #allocation1 [shape = 'u32[144,128]{1,0:T(1,128)}', space=vmem, size = 0x12000, scoped, tag = 'internal scratch']
  %s0 = inlined_call_operand.hbm [shape: f32[2,256,256], index: 0, kind: input, shape index: {}]
  %s1 = inlined_call_operand.hbm [shape: f32[2,256,256], index: 1, kind: input, shape index: {}]
  %s2 = inlined_call_operand.vmem [shape: f32[1,256], index: 2, kind: input, shape index: {}]
  %s3 = inlined_call_operand.vmem [shape: f32[1,256], index: 3, kind: input, shape index: {}]
  %s4 = inlined_call_operand.hbm [shape: f32[256,256], index: 4, kind: input, shape index: {}]
  %s5 = inlined_call_operand.hbm [shape: f32[256,256], index: 5, kind: input, shape index: {}]
  %s6 = inlined_call_operand.hbm [shape: f32[256,256], index: 6, kind: input, shape index: {}]
  %s7 = inlined_call_operand.hbm [shape: f32[2,256,256], index: 7, kind: output, shape index: {0}]
  %s8 = inlined_call_operand.hbm [shape: f32[2,256,256], index: 8, kind: output, shape index: {1}]
  %s9 = inlined_call_operand.hbm [shape: f32[2,256,256], index: 9, kind: output, shape index: {2}]
  %s10 = inlined_call_operand.hbm [shape: f32[2,256,256], index: 10, kind: output, shape index: {3}]
  %11 = xla_tuple %s7, %s8, %s9, %s10
  %s12 = sld [smem:[#allocation0]]
  $region105: #{tpu_custom_call.1} parent=0
    _
  %s14 = ssub.s32 1, %s12
  %s15 = scalar_select 0, %s14, %s12
  $region1: #{tpu_custom_call.1} parent=0
    #allocation2 [shape = 'u8[262144]{0}', space=vmem, size = 0x40000, scoped, tag = 'input window, operand 0']
    #allocation3 [shape = 's32[2]{0}', space=sflag, size = 0x8, scoped, tag = 'scoped memory for tpu_custom_call.1']
    #allocation4 [shape = 's32[2]{0}', space=sflag, size = 0x8, scoped, tag = 'scoped memory for tpu_custom_call.1']
    #allocation5 [shape = 'u8[262144]{0}', space=vmem, size = 0x40000, scoped, tag = 'input window, operand 1']
    #allocation6 [shape = 's32[2]{0}', space=sflag, size = 0x8, scoped, tag = 'scoped memory for tpu_custom_call.1']
    #allocation7 [shape = 'u8[262144]{0}', space=vmem, size = 0x40000, scoped, tag = 'input window, operand 4, single buffered']
    #allocation8 [shape = 'u8[262144]{0}', space=vmem, size = 0x40000, scoped, tag = 'input window, operand 5, single buffered']
    #allocation9 [shape = 's32[1]{0}', space=sflag, size = 0x4, scoped, tag = 'scoped memory for tpu_custom_call.1']
    #allocation10 [shape = 'u8[262144]{0}', space=vmem, size = 0x40000, scoped, tag = 'input window, operand 6, single buffered']
    #allocation11 [shape = 'u8[262144]{0}', space=vmem, size = 0x40000, scoped, tag = 'output window, operand 0']
    #allocation12 [shape = 'u8[262144]{0}', space=vmem, size = 0x40000, scoped, tag = 'output window, operand 1']
    #allocation13 [shape = 's32[2]{0}', space=sflag, size = 0x8, scoped, tag = 'scoped memory for tpu_custom_call.1']
    #allocation14 [shape = 'u8[262144]{0}', space=vmem, size = 0x40000, scoped, tag = 'output window, operand 2']
    #allocation15 [shape = 'u8[262144]{0}', space=vmem, size = 0x40000, scoped, tag = 'output window, operand 3']
    #allocation16 [shape = 's32[2]{0}', space=sflag, size = 0x8, scoped, tag = 'scoped memory for tpu_custom_call.1']
    %16 = vsyncpa [#allocation3], 0
    %s17 = scalar_lea.sflag [#allocation3], 1
    %18 = vsyncpa %s17, 0
    %19 = vsyncpa [#allocation6], 0
    %s20 = scalar_lea.sflag [#allocation6], 1
    %21 = vsyncpa %s20, 0
    %22 = vsyncpa [#allocation9], 0
    %23 = vsyncpa [#allocation4], 0
    %s24 = scalar_lea.sflag [#allocation4], 1
    %25 = vsyncpa %s24, 0
    %26 = vsyncpa [#allocation13], 0
    %s27 = scalar_lea.sflag [#allocation13], 1
    %28 = vsyncpa %s27, 0
    %29 = vsyncpa [#allocation16], 0
    %s30 = scalar_lea.sflag [#allocation16], 1
    %31 = vsyncpa %s30, 0
    loop: start=0, step=1, limit=6
    $region2: #{tpu_custom_call.1} parent=1 // loop_pre_header
      _
    $region3: #{tpu_custom_call.1} parent=1 // loop_header
      %s33 = sphi 0, %s37
      %p34 = scmp.ge.s32.totalorder %s33, 6
      %s40 = sphi 0, %s52
      %s41 = sphi 0, %s48
      %s42 = sphi 0, %s40
      %s43 = sphi 0, %s41
      %s44 = sphi 0, %s42
      %s45 = sphi 0, %s43
      %s57 = sphi 0, %s59
      %s60 = sphi 0, %s57
      %s61 = sphi 0, %s60
      %s77 = sphi 0, %s61
      %s85 = sphi 0, %s87
      %s88 = sphi 0, %s85
      %s89 = sphi 0, %s88
      %s105 = sphi 0, %s89
      %s109 = sphi 0, %s109
      %s111 = sphi 0, %s109
      %s112 = sphi 0, %s111
      %s126 = sphi 0, %s112
      %s130 = sphi 0, %s130
      %s132 = sphi 0, %s130
      %s133 = sphi 0, %s132
      %s147 = sphi 0, %s133
      %s151 = sphi 0, %s151
      %s153 = sphi 0, %s151
      %s154 = sphi 0, %s153
      %s168 = sphi 0, %s154
      %s172 = sphi 0, %s172
      %s174 = sphi 0, %s172
      %s175 = sphi 0, %s174
      %s189 = sphi 0, %s175
      %s193 = sphi 0, %s193
      %s195 = sphi 0, %s193
      %s196 = sphi 0, %s195
      %s210 = sphi 0, %s196
      %s218 = sphi 0, %s220
      %s221 = sphi 0, %s218
      %s222 = sphi 0, %s221
      %s238 = sphi 0, %s222
      %s246 = sphi 0, %s248
      %s249 = sphi 0, %s246
      %s250 = sphi 0, %s249
      %s266 = sphi 0, %s250
      %s274 = sphi 0, %s276
      %s277 = sphi 0, %s274
      %s278 = sphi 0, %s277
      %s294 = sphi 0, %s278
      %s302 = sphi 0, %s304
      %s305 = sphi 0, %s302
      %s306 = sphi 0, %s305
      %s322 = sphi 0, %s306
    $region4: #{tpu_custom_call.1} parent=1 // loop_header_branch
      %36 = sbr.rel (%p34) target = $region8
    $region5: #{tpu_custom_call.1} parent=1 // loop_body
      %s38 = ssub.s32 %s33, 1
      %s39 = ssub.s32 %s33, 2
      %s46 = sadd.s32 1, %s41
      %p47 = scmp.ge.s32.totalorder %s46, 2
      %s48 = scalar_select %p47, 0, %s46
      %s49 = sadd.s32 1, %s40
      %s50 = scalar_select %p47, %s49, %s40
      %p51 = scmp.ge.s32.totalorder %s50, 2
      %s52 = scalar_select %p51, 0, %s50
      %s53 = ssub.s32 %s40, %s52
      %s54 = ssub.s32 %s41, %s48
      %s55 = sor.u32 %s53, %s54
      %p56 = scmp.eq.s32.totalorder %s55, 0
      %s58 = sadd.s32 %s57, 1
      %s59 = scalar_select %p56, %s57, %s58
      %p62 = pneg %p56
      %p63 = scmp.eq.s32.totalorder %s33, 3
      %p64 = por %p62, %p63
      %p65 = scmp.ne.s32.totalorder %s57, %s60
      %p66 = scmp.eq.s32.totalorder %s33, 0
      %p67 = por %p65, %p66
      %p68 = scmp.ne.s32.totalorder %s57, %s60
      %p69 = scmp.eq.s32.totalorder %s38, 3
      %p70 = por %p68, %p69
      %p71 = scmp.ne.s32.totalorder %s60, %s61
      %p72 = scmp.eq.s32.totalorder %s38, 0
      %p73 = por %p71, %p72
      %p74 = scmp.ne.s32.totalorder %s60, %s61
      %p75 = scmp.eq.s32.totalorder %s39, 3
      %p76 = por %p74, %p75
      %p78 = scmp.ne.s32.totalorder %s61, %s77
      %p79 = scmp.eq.s32.totalorder %s39, 0
      %p80 = por %p78, %p79
      %s81 = ssub.s32 %s40, %s52
      %s82 = ssub.s32 %s41, %s48
      %s83 = sor.u32 %s81, %s82
      %p84 = scmp.eq.s32.totalorder %s83, 0
      %s86 = sadd.s32 %s85, 1
      %s87 = scalar_select %p84, %s85, %s86
      %p90 = pneg %p84
      %p91 = scmp.eq.s32.totalorder %s33, 3
      %p92 = por %p90, %p91
      %p93 = scmp.ne.s32.totalorder %s85, %s88
      %p94 = scmp.eq.s32.totalorder %s33, 0
      %p95 = por %p93, %p94
      %p96 = scmp.ne.s32.totalorder %s85, %s88
      %p97 = scmp.eq.s32.totalorder %s38, 3
      %p98 = por %p96, %p97
      %p99 = scmp.ne.s32.totalorder %s88, %s89
      %p100 = scmp.eq.s32.totalorder %s38, 0
      %p101 = por %p99, %p100
      %p102 = scmp.ne.s32.totalorder %s88, %s89
      %p103 = scmp.eq.s32.totalorder %s39, 3
      %p104 = por %p102, %p103
      %p106 = scmp.ne.s32.totalorder %s89, %s105
      %p107 = scmp.eq.s32.totalorder %s39, 0
      %p108 = por %p106, %p107
      %s110 = sadd.s32 %s109, 1
      %p113 = scmp.eq.s32.totalorder %s33, 3
      %p114 = scmp.ne.s32.totalorder %s109, %s111
      %p115 = scmp.eq.s32.totalorder %s33, 0
      %p116 = por %p114, %p115
      %p117 = scmp.ne.s32.totalorder %s109, %s111
      %p118 = scmp.eq.s32.totalorder %s38, 3
      %p119 = por %p117, %p118
      %p120 = scmp.ne.s32.totalorder %s111, %s112
      %p121 = scmp.eq.s32.totalorder %s38, 0
      %p122 = por %p120, %p121
      %p123 = scmp.ne.s32.totalorder %s111, %s112
      %p124 = scmp.eq.s32.totalorder %s39, 3
      %p125 = por %p123, %p124
      %p127 = scmp.ne.s32.totalorder %s112, %s126
      %p128 = scmp.eq.s32.totalorder %s39, 0
      %p129 = por %p127, %p128
      %s131 = sadd.s32 %s130, 1
      %p134 = scmp.eq.s32.totalorder %s33, 3
      %p135 = scmp.ne.s32.totalorder %s130, %s132
      %p136 = scmp.eq.s32.totalorder %s33, 0
      %p137 = por %p135, %p136
      %p138 = scmp.ne.s32.totalorder %s130, %s132
      %p139 = scmp.eq.s32.totalorder %s38, 3
      %p140 = por %p138, %p139
      %p141 = scmp.ne.s32.totalorder %s132, %s133
      %p142 = scmp.eq.s32.totalorder %s38, 0
      %p143 = por %p141, %p142
      %p144 = scmp.ne.s32.totalorder %s132, %s133
      %p145 = scmp.eq.s32.totalorder %s39, 3
      %p146 = por %p144, %p145
      %p148 = scmp.ne.s32.totalorder %s133, %s147
      %p149 = scmp.eq.s32.totalorder %s39, 0
      %p150 = por %p148, %p149
      %s152 = sadd.s32 %s151, 1
      %p155 = scmp.eq.s32.totalorder %s33, 3
      %p156 = scmp.ne.s32.totalorder %s151, %s153
      %p157 = scmp.eq.s32.totalorder %s33, 0
      %p158 = por %p156, %p157
      %p159 = scmp.ne.s32.totalorder %s151, %s153
      %p160 = scmp.eq.s32.totalorder %s38, 3
      %p161 = por %p159, %p160
      %p162 = scmp.ne.s32.totalorder %s153, %s154
      %p163 = scmp.eq.s32.totalorder %s38, 0
      %p164 = por %p162, %p163
      %p165 = scmp.ne.s32.totalorder %s153, %s154
      %p166 = scmp.eq.s32.totalorder %s39, 3
      %p167 = por %p165, %p166
      %p169 = scmp.ne.s32.totalorder %s154, %s168
      %p170 = scmp.eq.s32.totalorder %s39, 0
      %p171 = por %p169, %p170
      %s173 = sadd.s32 %s172, 1
      %p176 = scmp.eq.s32.totalorder %s33, 3
      %p177 = scmp.ne.s32.totalorder %s172, %s174
      %p178 = scmp.eq.s32.totalorder %s33, 0
      %p179 = por %p177, %p178
      %p180 = scmp.ne.s32.totalorder %s172, %s174
      %p181 = scmp.eq.s32.totalorder %s38, 3
      %p182 = por %p180, %p181
      %p183 = scmp.ne.s32.totalorder %s174, %s175
      %p184 = scmp.eq.s32.totalorder %s38, 0
      %p185 = por %p183, %p184
      %p186 = scmp.ne.s32.totalorder %s174, %s175
      %p187 = scmp.eq.s32.totalorder %s39, 3
      %p188 = por %p186, %p187
      %p190 = scmp.ne.s32.totalorder %s175, %s189
      %p191 = scmp.eq.s32.totalorder %s39, 0
      %p192 = por %p190, %p191
      %s194 = sadd.s32 %s193, 1
      %p197 = scmp.eq.s32.totalorder %s33, 3
      %p198 = scmp.ne.s32.totalorder %s193, %s195
      %p199 = scmp.eq.s32.totalorder %s33, 0
      %p200 = por %p198, %p199
      %p201 = scmp.ne.s32.totalorder %s193, %s195
      %p202 = scmp.eq.s32.totalorder %s38, 3
      %p203 = por %p201, %p202
      %p204 = scmp.ne.s32.totalorder %s195, %s196
      %p205 = scmp.eq.s32.totalorder %s38, 0
      %p206 = por %p204, %p205
      %p207 = scmp.ne.s32.totalorder %s195, %s196
      %p208 = scmp.eq.s32.totalorder %s39, 3
      %p209 = por %p207, %p208
      %p211 = scmp.ne.s32.totalorder %s196, %s210
      %p212 = scmp.eq.s32.totalorder %s39, 0
      %p213 = por %p211, %p212
      %s214 = ssub.s32 %s40, %s52
      %s215 = ssub.s32 %s41, %s48
      %s216 = sor.u32 %s214, %s215
      %p217 = scmp.eq.s32.totalorder %s216, 0
      %s219 = sadd.s32 %s218, 1
      %s220 = scalar_select %p217, %s218, %s219
      %p223 = pneg %p217
      %p224 = scmp.eq.s32.totalorder %s33, 3
      %p225 = por %p223, %p224
      %p226 = scmp.ne.s32.totalorder %s218, %s221
      %p227 = scmp.eq.s32.totalorder %s33, 0
      %p228 = por %p226, %p227
      %p229 = scmp.ne.s32.totalorder %s218, %s221
      %p230 = scmp.eq.s32.totalorder %s38, 3
      %p231 = por %p229, %p230
      %p232 = scmp.ne.s32.totalorder %s221, %s222
      %p233 = scmp.eq.s32.totalorder %s38, 0
      %p234 = por %p232, %p233
      %p235 = scmp.ne.s32.totalorder %s221, %s222
      %p236 = scmp.eq.s32.totalorder %s39, 3
      %p237 = por %p235, %p236
      %p239 = scmp.ne.s32.totalorder %s222, %s238
      %p240 = scmp.eq.s32.totalorder %s39, 0
      %p241 = por %p239, %p240
      %s242 = ssub.s32 %s40, %s52
      %s243 = ssub.s32 %s41, %s48
      %s244 = sor.u32 %s242, %s243
      %p245 = scmp.eq.s32.totalorder %s244, 0
      %s247 = sadd.s32 %s246, 1
      %s248 = scalar_select %p245, %s246, %s247
      %p251 = pneg %p245
      %p252 = scmp.eq.s32.totalorder %s33, 3
      %p253 = por %p251, %p252
      %p254 = scmp.ne.s32.totalorder %s246, %s249
      %p255 = scmp.eq.s32.totalorder %s33, 0
      %p256 = por %p254, %p255
      %p257 = scmp.ne.s32.totalorder %s246, %s249
      %p258 = scmp.eq.s32.totalorder %s38, 3
      %p259 = por %p257, %p258
      %p260 = scmp.ne.s32.totalorder %s249, %s250
      %p261 = scmp.eq.s32.totalorder %s38, 0
      %p262 = por %p260, %p261
      %p263 = scmp.ne.s32.totalorder %s249, %s250
      %p264 = scmp.eq.s32.totalorder %s39, 3
      %p265 = por %p263, %p264
      %p267 = scmp.ne.s32.totalorder %s250, %s266
      %p268 = scmp.eq.s32.totalorder %s39, 0
      %p269 = por %p267, %p268
      %s270 = ssub.s32 %s40, %s52
      %s271 = ssub.s32 %s41, %s48
      %s272 = sor.u32 %s270, %s271
      %p273 = scmp.eq.s32.totalorder %s272, 0
      %s275 = sadd.s32 %s274, 1
      %s276 = scalar_select %p273, %s274, %s275
      %p279 = pneg %p273
      %p280 = scmp.eq.s32.totalorder %s33, 3
      %p281 = por %p279, %p280
      %p282 = scmp.ne.s32.totalorder %s274, %s277
      %p283 = scmp.eq.s32.totalorder %s33, 0
      %p284 = por %p282, %p283
      %p285 = scmp.ne.s32.totalorder %s274, %s277
      %p286 = scmp.eq.s32.totalorder %s38, 3
      %p287 = por %p285, %p286
      %p288 = scmp.ne.s32.totalorder %s277, %s278
      %p289 = scmp.eq.s32.totalorder %s38, 0
      %p290 = por %p288, %p289
      %p291 = scmp.ne.s32.totalorder %s277, %s278
      %p292 = scmp.eq.s32.totalorder %s39, 3
      %p293 = por %p291, %p292
      %p295 = scmp.ne.s32.totalorder %s278, %s294
      %p296 = scmp.eq.s32.totalorder %s39, 0
      %p297 = por %p295, %p296
      %s298 = ssub.s32 %s40, %s52
      %s299 = ssub.s32 %s41, %s48
      %s300 = sor.u32 %s298, %s299
      %p301 = scmp.eq.s32.totalorder %s300, 0
      %s303 = sadd.s32 %s302, 1
      %s304 = scalar_select %p301, %s302, %s303
      %p307 = pneg %p301
      %p308 = scmp.eq.s32.totalorder %s33, 3
      %p309 = por %p307, %p308
      %p310 = scmp.ne.s32.totalorder %s302, %s305
      %p311 = scmp.eq.s32.totalorder %s33, 0
      %p312 = por %p310, %p311
      %p313 = scmp.ne.s32.totalorder %s302, %s305
      %p314 = scmp.eq.s32.totalorder %s38, 3
      %p315 = por %p313, %p314
      %p316 = scmp.ne.s32.totalorder %s305, %s306
      %p317 = scmp.eq.s32.totalorder %s38, 0
      %p318 = por %p316, %p317
      %p319 = scmp.ne.s32.totalorder %s305, %s306
      %p320 = scmp.eq.s32.totalorder %s39, 3
      %p321 = por %p319, %p320
      %p323 = scmp.ne.s32.totalorder %s306, %s322
      %p324 = scmp.eq.s32.totalorder %s39, 0
      %p325 = por %p323, %p324
      %p326 = scmp.le.s32.totalorder 1, %s33
      %p327 = scmp.lt.s32.totalorder %s33, 5
      %p328 = pnand %p326, %p327
      %p329 = pneg %p328
      // Predicated region
      $region9: #{tpu_custom_call.1} parent=5 // pred_check
        _
      $region10: #{tpu_custom_call.1} parent=5 // pred_check_branch
        %331 = sbr.rel (%p328) target = $region12
      $region11: #{tpu_custom_call.1} parent=5 // pred_region
        %s332 = ssub.s32 %s33, 1
        // Predicated region
        $region13: #{tpu_custom_call.1} parent=11 // pred_check
          %p333 = pneg %p122
        $region14: #{tpu_custom_call.1} parent=11 // pred_check_branch
          %335 = sbr.rel (%p333) target = $region16
        $region15: #{tpu_custom_call.1} parent=11 // pred_region
          _
        $region16: #{tpu_custom_call.1} parent=11 // pred_fallthru
          _
        // Predicated region
        $region17: #{tpu_custom_call.1} parent=11 // pred_check
          %p336 = pneg %p143
        $region18: #{tpu_custom_call.1} parent=11 // pred_check_branch
          %338 = sbr.rel (%p336) target = $region20
        $region19: #{tpu_custom_call.1} parent=11 // pred_region
          _
        $region20: #{tpu_custom_call.1} parent=11 // pred_fallthru
          _
        // Predicated region
        $region21: #{tpu_custom_call.1} parent=11 // pred_check
          %p339 = pneg %p164
        $region22: #{tpu_custom_call.1} parent=11 // pred_check_branch
          %341 = sbr.rel (%p339) target = $region24
        $region23: #{tpu_custom_call.1} parent=11 // pred_region
          %s343 = ssub.s32 8192, 8192
          %344 = vsyncadd [#allocation6], %s343
          %s345 = sshll.u32 [#allocation7], 4
          %s346 = int_to_ptr.vmem [resolvable:$true] %s345
          %351 = dma.hbm_to_vmem [thread:$0]  %s4, 8192, %s346, [#allocation6], 256, 256, 16
        $region24: #{tpu_custom_call.1} parent=11 // pred_fallthru
          _
        // Predicated region
        $region25: #{tpu_custom_call.1} parent=11 // pred_check
          %p352 = pneg %p185
        $region26: #{tpu_custom_call.1} parent=11 // pred_check_branch
          %354 = sbr.rel (%p352) target = $region28
        $region27: #{tpu_custom_call.1} parent=11 // pred_region
          %s356 = ssub.s32 8192, 8192
          %357 = vsyncadd [#allocation9], %s356
          %s358 = sshll.u32 [#allocation8], 4
          %s359 = int_to_ptr.vmem [resolvable:$true] %s358
          %364 = dma.hbm_to_vmem [thread:$0]  %s5, 8192, %s359, [#allocation9], 256, 256, 16
        $region28: #{tpu_custom_call.1} parent=11 // pred_fallthru
          _
        // Predicated region
        $region29: #{tpu_custom_call.1} parent=11 // pred_check
          %p365 = pneg %p206
        $region30: #{tpu_custom_call.1} parent=11 // pred_check_branch
          %367 = sbr.rel (%p365) target = $region32
        $region31: #{tpu_custom_call.1} parent=11 // pred_region
          %s369 = ssub.s32 8192, 8192
          %370 = vsyncadd [#allocation9], %s369
          %s371 = sshll.u32 [#allocation10], 4
          %s372 = int_to_ptr.vmem [resolvable:$true] %s371
          %377 = dma.hbm_to_vmem [thread:$0]  %s6, 8192, %s372, [#allocation9], 256, 256, 16
        $region32: #{tpu_custom_call.1} parent=11 // pred_fallthru
          _
      $region12: #{tpu_custom_call.1} parent=5 // pred_fallthru
        _
      %p378 = scmp.lt.s32.totalorder %s33, 4
      // Predicated region
      $region33: #{tpu_custom_call.1} parent=5 // pred_check
        %p379 = pneg %p378
      $region34: #{tpu_custom_call.1} parent=5 // pred_check_branch
        %381 = sbr.rel (%p379) target = $region36
      $region35: #{tpu_custom_call.1} parent=5 // pred_region
        // Predicated region
        $region37: #{tpu_custom_call.1} parent=35 // pred_check
          %p382 = pneg %p67
        $region38: #{tpu_custom_call.1} parent=35 // pred_check_branch
          %384 = sbr.rel (%p382) target = $region40
        $region39: #{tpu_custom_call.1} parent=35 // pred_region
          %s385 = sand.u32 %s57, 1
          %s386 = scalar_lea.sflag [#allocation3], %s385
          %s387 = sand.u32 %s57, 1
          %s388 = smul.addr %s387, 256
          %s389 = scalar_lea.vmem [#allocation2], %s388
          %s390 = smul.u32 16, %s41
          %s392 = ssub.s32 4096, 4096
          %393 = vsyncadd %s386, %s392
          %s394 = smul.addr %s390, 2
          %s395 = smul.addr %s40, 64
          %s396 = sadd.s32 %s394, %s395
          %s397 = smul.addr %s396, 128
          %s398 = scalar_lea.hbm %s0, %s397
          %s399 = sshll.u32 %s389, 4
          %s400 = int_to_ptr.vmem [resolvable:$true] %s399
          %405 = dma.hbm_to_vmem [thread:$0]  %s398, 4096, %s400, %s386, 256, 256, 16
        $region40: #{tpu_custom_call.1} parent=35 // pred_fallthru
          _
        // Predicated region
        $region41: #{tpu_custom_call.1} parent=35 // pred_check
          %p406 = pneg %p95
        $region42: #{tpu_custom_call.1} parent=35 // pred_check_branch
          %408 = sbr.rel (%p406) target = $region44
        $region43: #{tpu_custom_call.1} parent=35 // pred_region
          %s409 = sand.u32 %s33, 1
          %s410 = scalar_lea.sflag [#allocation6], %s409
          %s411 = sand.u32 %s85, 1
          %s412 = smul.addr %s411, 256
          %s413 = scalar_lea.vmem [#allocation5], %s412
          %s414 = smul.u32 16, %s41
          %s416 = ssub.s32 4096, 4096
          %417 = vsyncadd %s410, %s416
          %s418 = smul.addr %s414, 2
          %s419 = smul.addr %s40, 64
          %s420 = sadd.s32 %s418, %s419
          %s421 = smul.addr %s420, 128
          %s422 = scalar_lea.hbm %s1, %s421
          %s423 = sshll.u32 %s413, 4
          %s424 = int_to_ptr.vmem [resolvable:$true] %s423
          %429 = dma.hbm_to_vmem [thread:$0]  %s422, 4096, %s424, %s410, 256, 256, 16
        $region44: #{tpu_custom_call.1} parent=35 // pred_fallthru
          _
      $region36: #{tpu_custom_call.1} parent=5 // pred_fallthru
        _
      %p430 = scmp.le.s32.totalorder 1, %s33
      %p431 = scmp.lt.s32.totalorder %s33, 5
      %p432 = pnand %p430, %p431
      %p433 = pneg %p432
      // Predicated region
      $region45: #{tpu_custom_call.1} parent=5 // pred_check
        _
      $region46: #{tpu_custom_call.1} parent=5 // pred_check_branch
        %435 = sbr.rel (%p432) target = $region48
      $region47: #{tpu_custom_call.1} parent=5 // pred_region
        %s436 = ssub.s32 %s33, 1
        %s437 = sand.u32 %s60, 1
        %s438 = scalar_lea.sflag [#allocation3], %s437
        %s439 = sand.u32 %s60, 1
        %s440 = smul.addr %s439, 256
        %s441 = scalar_lea.vmem [#allocation2], %s440
        // Predicated region
        $region49: #{tpu_custom_call.1} parent=47 // pred_check
          %p442 = pneg %p73
        $region50: #{tpu_custom_call.1} parent=47 // pred_check_branch
          %444 = sbr.rel (%p442) target = $region52
        $region51: #{tpu_custom_call.1} parent=47 // pred_region
          %445 = dma.done %s438, 4096
        $region52: #{tpu_custom_call.1} parent=47 // pred_fallthru
          _
        %s446 = sand.u32 %s38, 1
        %s447 = scalar_lea.sflag [#allocation6], %s446
        %s448 = sand.u32 %s88, 1
        %s449 = smul.addr %s448, 256
        %s450 = scalar_lea.vmem [#allocation5], %s449
        // Predicated region
        $region53: #{tpu_custom_call.1} parent=47 // pred_check
          %p451 = pneg %p101
        $region54: #{tpu_custom_call.1} parent=47 // pred_check_branch
          %453 = sbr.rel (%p451) target = $region56
        $region55: #{tpu_custom_call.1} parent=47 // pred_region
          %454 = dma.done %s447, 4096
        $region56: #{tpu_custom_call.1} parent=47 // pred_fallthru
          _
        // Predicated region
        $region57: #{tpu_custom_call.1} parent=47 // pred_check
          %p455 = pneg %p164
        $region58: #{tpu_custom_call.1} parent=47 // pred_check_branch
          %457 = sbr.rel (%p455) target = $region60
        $region59: #{tpu_custom_call.1} parent=47 // pred_region
          %458 = dma.done [#allocation6], 8192
        $region60: #{tpu_custom_call.1} parent=47 // pred_fallthru
          _
        // Predicated region
        $region61: #{tpu_custom_call.1} parent=47 // pred_check
          %p459 = pneg %p185
        $region62: #{tpu_custom_call.1} parent=47 // pred_check_branch
          %461 = sbr.rel (%p459) target = $region64
        $region63: #{tpu_custom_call.1} parent=47 // pred_region
          %462 = dma.done [#allocation9], 8192
        $region64: #{tpu_custom_call.1} parent=47 // pred_fallthru
          _
        // Predicated region
        $region65: #{tpu_custom_call.1} parent=47 // pred_check
          %p463 = pneg %p206
        $region66: #{tpu_custom_call.1} parent=47 // pred_check_branch
          %465 = sbr.rel (%p463) target = $region68
        $region67: #{tpu_custom_call.1} parent=47 // pred_region
          %466 = dma.done [#allocation9], 8192
        $region68: #{tpu_custom_call.1} parent=47 // pred_fallthru
          _
        %s467 = sand.u32 %s60, 1
        %s468 = scalar_lea.sflag [#allocation3], %s467
        %s469 = sand.u32 %s60, 1
        %s470 = smul.addr %s469, 256
        %s471 = scalar_lea.vmem [#allocation2], %s470
        %p472 = pneg %p73
        %p473 = pneg %p70
        %s474 = sand.u32 %s38, 1
        %s475 = scalar_lea.sflag [#allocation6], %s474
        %s476 = sand.u32 %s88, 1
        %s477 = smul.addr %s476, 256
        %s478 = scalar_lea.vmem [#allocation5], %s477
        %p479 = pneg %p101
        %p480 = pneg %p98
        %p481 = pneg %p122
        %p482 = pneg %p119
        %p483 = pneg %p143
        %p484 = pneg %p140
        %p485 = pneg %p164
        %p486 = pneg %p161
        %p487 = pneg %p185
        %p488 = pneg %p182
        %p489 = pneg %p206
        %p490 = pneg %p203
        %p491 = pneg %p234
        %p492 = pneg %p231
        %s493 = sand.u32 %s221, 1
        %s494 = scalar_lea.sflag [#allocation4], %s493
        %s495 = sand.u32 %s221, 1
        %s496 = smul.addr %s495, 256
        %s497 = scalar_lea.vmem [#allocation11], %s496
        %p498 = pneg %p262
        %p499 = pneg %p259
        %s500 = sand.u32 %s38, 1
        %s501 = scalar_lea.sflag [#allocation13], %s500
        %s502 = sand.u32 %s249, 1
        %s503 = smul.addr %s502, 256
        %s504 = scalar_lea.vmem [#allocation12], %s503
        %p505 = pneg %p290
        %p506 = pneg %p287
        %s507 = sand.u32 %s38, 1
        %s508 = scalar_lea.sflag [#allocation13], %s507
        %s509 = sand.u32 %s277, 1
        %s510 = smul.addr %s509, 256
        %s511 = scalar_lea.vmem [#allocation14], %s510
        %p512 = pneg %p318
        %p513 = pneg %p315
        %s514 = sand.u32 %s305, 1
        %s515 = scalar_lea.sflag [#allocation16], %s514
        %s516 = sand.u32 %s305, 1
        %s517 = smul.addr %s516, 256
        %s518 = scalar_lea.vmem [#allocation15], %s517
        %s519 = smul.u32 16, %s43
        %s520 = smul.u32 16, %s43
        %s521 = smul.u32 16, %s43
        %s522 = smul.u32 16, %s43
        %s523 = smul.u32 16, %s43
        %s524 = smul.u32 16, %s43
        %v525 = vld [vmem:[%s441] sm:$0xff]
        %v526 = vld [vmem:[%s441 + $0x8] sm:$0xff]
        %v527 = vld [vmem:[%s441 + $0x10] sm:$0xff]
        %v528 = vld [vmem:[%s441 + $0x18] sm:$0xff]
        %v529 = vld [vmem:[%s441 + $0x20] sm:$0xff]
        %v530 = vld [vmem:[%s441 + $0x28] sm:$0xff]
        %v531 = vld [vmem:[%s441 + $0x30] sm:$0xff]
        %v532 = vld [vmem:[%s441 + $0x38] sm:$0xff]
        %v533 = vld [vmem:[%s441 + $0x40] sm:$0xff]
        %v534 = vld [vmem:[%s441 + $0x48] sm:$0xff]
        %v535 = vld [vmem:[%s441 + $0x50] sm:$0xff]
        %v536 = vld [vmem:[%s441 + $0x58] sm:$0xff]
        %v537 = vld [vmem:[%s441 + $0x60] sm:$0xff]
        %v538 = vld [vmem:[%s441 + $0x68] sm:$0xff]
        %v539 = vld [vmem:[%s441 + $0x70] sm:$0xff]
        %v540 = vld [vmem:[%s441 + $0x78] sm:$0xff]
        %v541 = vld [vmem:[%s441 + $0x80] sm:$0xff]
        %v542 = vld [vmem:[%s441 + $0x88] sm:$0xff]
        %v543 = vld [vmem:[%s441 + $0x90] sm:$0xff]
        %v544 = vld [vmem:[%s441 + $0x98] sm:$0xff]
        %v545 = vld [vmem:[%s441 + $0xa0] sm:$0xff]
        %v546 = vld [vmem:[%s441 + $0xa8] sm:$0xff]
        %v547 = vld [vmem:[%s441 + $0xb0] sm:$0xff]
        %v548 = vld [vmem:[%s441 + $0xb8] sm:$0xff]
        %v549 = vld [vmem:[%s441 + $0xc0] sm:$0xff]
        %v550 = vld [vmem:[%s441 + $0xc8] sm:$0xff]
        %v551 = vld [vmem:[%s441 + $0xd0] sm:$0xff]
        %v552 = vld [vmem:[%s441 + $0xd8] sm:$0xff]
        %v553 = vld [vmem:[%s441 + $0xe0] sm:$0xff]
        %v554 = vld [vmem:[%s441 + $0xe8] sm:$0xff]
        %v555 = vld [vmem:[%s441 + $0xf0] sm:$0xff]
        %v556 = vld [vmem:[%s441 + $0xf8] sm:$0xff]
        %v557 = vld [vmem:[%s450] sm:$0xff]
        %v558 = vld [vmem:[%s450 + $0x8] sm:$0xff]
        %v559 = vld [vmem:[%s450 + $0x10] sm:$0xff]
        %v560 = vld [vmem:[%s450 + $0x18] sm:$0xff]
        %v561 = vld [vmem:[%s450 + $0x20] sm:$0xff]
        %v562 = vld [vmem:[%s450 + $0x28] sm:$0xff]
        %v563 = vld [vmem:[%s450 + $0x30] sm:$0xff]
        %v564 = vld [vmem:[%s450 + $0x38] sm:$0xff]
        %v565 = vld [vmem:[%s450 + $0x40] sm:$0xff]
        %v566 = vld [vmem:[%s450 + $0x48] sm:$0xff]
        %v567 = vld [vmem:[%s450 + $0x50] sm:$0xff]
        %v568 = vld [vmem:[%s450 + $0x58] sm:$0xff]
        %v569 = vld [vmem:[%s450 + $0x60] sm:$0xff]
        %v570 = vld [vmem:[%s450 + $0x68] sm:$0xff]
        %v571 = vld [vmem:[%s450 + $0x70] sm:$0xff]
        %v572 = vld [vmem:[%s450 + $0x78] sm:$0xff]
        %v573 = vld [vmem:[%s450 + $0x80] sm:$0xff]
        %v574 = vld [vmem:[%s450 + $0x88] sm:$0xff]
        %v575 = vld [vmem:[%s450 + $0x90] sm:$0xff]
        %v576 = vld [vmem:[%s450 + $0x98] sm:$0xff]
        %v577 = vld [vmem:[%s450 + $0xa0] sm:$0xff]
        %v578 = vld [vmem:[%s450 + $0xa8] sm:$0xff]
        %v579 = vld [vmem:[%s450 + $0xb0] sm:$0xff]
        %v580 = vld [vmem:[%s450 + $0xb8] sm:$0xff]
        %v581 = vld [vmem:[%s450 + $0xc0] sm:$0xff]
        %v582 = vld [vmem:[%s450 + $0xc8] sm:$0xff]
        %v583 = vld [vmem:[%s450 + $0xd0] sm:$0xff]
        %v584 = vld [vmem:[%s450 + $0xd8] sm:$0xff]
        %v585 = vld [vmem:[%s450 + $0xe0] sm:$0xff]
        %v586 = vld [vmem:[%s450 + $0xe8] sm:$0xff]
        %v587 = vld [vmem:[%s450 + $0xf0] sm:$0xff]
        %v588 = vld [vmem:[%s450 + $0xf8] sm:$0xff]
        %v589 = vadd.f32 %v525, %v557
        %v590 = vadd.f32 %v526, %v558
        %v591 = vadd.f32 %v527, %v559
        %v592 = vadd.f32 %v528, %v560
        %v593 = vadd.f32 %v529, %v561
        %v594 = vadd.f32 %v530, %v562
        %v595 = vadd.f32 %v531, %v563
        %v596 = vadd.f32 %v532, %v564
        %v597 = vadd.f32 %v533, %v565
        %v598 = vadd.f32 %v534, %v566
        %v599 = vadd.f32 %v535, %v567
        %v600 = vadd.f32 %v536, %v568
        %v601 = vadd.f32 %v537, %v569
        %v602 = vadd.f32 %v538, %v570
        %v603 = vadd.f32 %v539, %v571
        %v604 = vadd.f32 %v540, %v572
        %v605 = vadd.f32 %v541, %v573
        %v606 = vadd.f32 %v542, %v574
        %v607 = vadd.f32 %v543, %v575
        %v608 = vadd.f32 %v544, %v576
        %v609 = vadd.f32 %v545, %v577
        %v610 = vadd.f32 %v546, %v578
        %v611 = vadd.f32 %v547, %v579
        %v612 = vadd.f32 %v548, %v580
        %v613 = vadd.f32 %v549, %v581
        %v614 = vadd.f32 %v550, %v582
        %v615 = vadd.f32 %v551, %v583
        %v616 = vadd.f32 %v552, %v584
        %v617 = vadd.f32 %v553, %v585
        %v618 = vadd.f32 %v554, %v586
        %v619 = vadd.f32 %v555, %v587
        %v620 = vadd.f32 %v556, %v588
        %v621 = vld [vmem:[%s2] sm:$0x3]
        %v622 = vld [vmem:[%s3] sm:$0x3]
        %v623 = vmul.f32 %v589, %v589
        %v624 = vmul.f32 %v590, %v590
        %v625 = vmul.f32 %v591, %v591
        %v626 = vmul.f32 %v592, %v592
        %v627 = vmul.f32 %v593, %v593
        %v628 = vmul.f32 %v594, %v594
        %v629 = vmul.f32 %v595, %v595
        %v630 = vmul.f32 %v596, %v596
        %v631 = vmul.f32 %v597, %v597
        %v632 = vmul.f32 %v598, %v598
        %v633 = vmul.f32 %v599, %v599
        %v634 = vmul.f32 %v600, %v600
        %v635 = vmul.f32 %v601, %v601
        %v636 = vmul.f32 %v602, %v602
        %v637 = vmul.f32 %v603, %v603
        %v638 = vmul.f32 %v604, %v604
        %v639 = vmul.f32 %v605, %v605
        %v640 = vmul.f32 %v606, %v606
        %v641 = vmul.f32 %v607, %v607
        %v642 = vmul.f32 %v608, %v608
        %v643 = vmul.f32 %v609, %v609
        %v644 = vmul.f32 %v610, %v610
        %v645 = vmul.f32 %v611, %v611
        %v646 = vmul.f32 %v612, %v612
        %v647 = vmul.f32 %v613, %v613
        %v648 = vmul.f32 %v614, %v614
        %v649 = vmul.f32 %v615, %v615
        %v650 = vmul.f32 %v616, %v616
        %v651 = vmul.f32 %v617, %v617
        %v652 = vmul.f32 %v618, %v618
        %v653 = vmul.f32 %v619, %v619
        %v654 = vmul.f32 %v620, %v620
        %v655 = vadd.f32 %v623, %v624
        %656 = vadd.xlane.f32.xlu0 %v655
        %v657 = vpop.xlane.xlu0 %656
        %v658 = vadd.f32 %v625, %v626
        %659 = vadd.xlane.f32.xlu0 %v658
        %v660 = vpop.xlane.xlu0 %659
        %v661 = vadd.f32 %v627, %v628
        %662 = vadd.xlane.f32.xlu0 %v661
        %v663 = vpop.xlane.xlu0 %662
        %v664 = vadd.f32 %v629, %v630
        %665 = vadd.xlane.f32.xlu0 %v664
        %v666 = vpop.xlane.xlu0 %665
        %v667 = vadd.f32 %v631, %v632
        %668 = vadd.xlane.f32.xlu0 %v667
        %v669 = vpop.xlane.xlu0 %668
        %v670 = vadd.f32 %v633, %v634
        %671 = vadd.xlane.f32.xlu0 %v670
        %v672 = vpop.xlane.xlu0 %671
        %v673 = vadd.f32 %v635, %v636
        %674 = vadd.xlane.f32.xlu0 %v673
        %v675 = vpop.xlane.xlu0 %674
        %v676 = vadd.f32 %v637, %v638
        %677 = vadd.xlane.f32.xlu0 %v676
        %v678 = vpop.xlane.xlu0 %677
        %v679 = vadd.f32 %v639, %v640
        %680 = vadd.xlane.f32.xlu0 %v679
        %v681 = vpop.xlane.xlu0 %680
        %v682 = vadd.f32 %v641, %v642
        %683 = vadd.xlane.f32.xlu0 %v682
        %v684 = vpop.xlane.xlu0 %683
        %v685 = vadd.f32 %v643, %v644
        %686 = vadd.xlane.f32.xlu0 %v685
        %v687 = vpop.xlane.xlu0 %686
        %v688 = vadd.f32 %v645, %v646
        %689 = vadd.xlane.f32.xlu0 %v688
        %v690 = vpop.xlane.xlu0 %689
        %v691 = vadd.f32 %v647, %v648
        %692 = vadd.xlane.f32.xlu0 %v691
        %v693 = vpop.xlane.xlu0 %692
        %v694 = vadd.f32 %v649, %v650
        %695 = vadd.xlane.f32.xlu0 %v694
        %v696 = vpop.xlane.xlu0 %695
        %v697 = vadd.f32 %v651, %v652
        %698 = vadd.xlane.f32.xlu0 %v697
        %v699 = vpop.xlane.xlu0 %698
        %v700 = vadd.f32 %v653, %v654
        %701 = vadd.xlane.f32.xlu0 %v700
        %v702 = vpop.xlane.xlu0 %701
        %v703 = vrcp.pop 256.0
        %v704 = vmul.f32 %v657, %v703
        %v705 = vmul.f32 %v660, %v703
        %v706 = vmul.f32 %v663, %v703
        %v707 = vmul.f32 %v666, %v703
        %v708 = vmul.f32 %v669, %v703
        %v709 = vmul.f32 %v672, %v703
        %v710 = vmul.f32 %v675, %v703
        %v711 = vmul.f32 %v678, %v703
        %v712 = vmul.f32 %v681, %v703
        %v713 = vmul.f32 %v684, %v703
        %v714 = vmul.f32 %v687, %v703
        %v715 = vmul.f32 %v690, %v703
        %v716 = vmul.f32 %v693, %v703
        %v717 = vmul.f32 %v696, %v703
        %v718 = vmul.f32 %v699, %v703
        %v719 = vmul.f32 %v702, %v703
        %v720 = vadd.f32 %v704, 1e-05
        %v721 = vadd.f32 %v705, 1e-05
        %v722 = vadd.f32 %v706, 1e-05
        %v723 = vadd.f32 %v707, 1e-05
        %v724 = vadd.f32 %v708, 1e-05
        %v725 = vadd.f32 %v709, 1e-05
        %v726 = vadd.f32 %v710, 1e-05
        %v727 = vadd.f32 %v711, 1e-05
        %v728 = vadd.f32 %v712, 1e-05
        %v729 = vadd.f32 %v713, 1e-05
        %v730 = vadd.f32 %v714, 1e-05
        %v731 = vadd.f32 %v715, 1e-05
        %v732 = vadd.f32 %v716, 1e-05
        %v733 = vadd.f32 %v717, 1e-05
        %v734 = vadd.f32 %v718, 1e-05
        %v735 = vadd.f32 %v719, 1e-05
        %v736 = vrsqrt.pop %v720
        %v737 = vrsqrt.pop %v721
        %v738 = vrsqrt.pop %v722
        %v739 = vrsqrt.pop %v723
        %v740 = vrsqrt.pop %v724
        %v741 = vrsqrt.pop %v725
        %v742 = vrsqrt.pop %v726
        %v743 = vrsqrt.pop %v727
        %v744 = vrsqrt.pop %v728
        %v745 = vrsqrt.pop %v729
        %v746 = vrsqrt.pop %v730
        %v747 = vrsqrt.pop %v731
        %v748 = vrsqrt.pop %v732
        %v749 = vrsqrt.pop %v733
        %v750 = vrsqrt.pop %v734
        %v751 = vrsqrt.pop %v735
        %v752 = vmul.f32 %v589, %v736
        %v753 = vmul.f32 %v590, %v736
        %v754 = vmul.f32 %v591, %v737
        %v755 = vmul.f32 %v592, %v737
        %v756 = vmul.f32 %v593, %v738
        %v757 = vmul.f32 %v594, %v738
        %v758 = vmul.f32 %v595, %v739
        %v759 = vmul.f32 %v596, %v739
        %v760 = vmul.f32 %v597, %v740
        %v761 = vmul.f32 %v598, %v740
        %v762 = vmul.f32 %v599, %v741
        %v763 = vmul.f32 %v600, %v741
        %v764 = vmul.f32 %v601, %v742
        %v765 = vmul.f32 %v602, %v742
        %v766 = vmul.f32 %v603, %v743
        %v767 = vmul.f32 %v604, %v743
        %v768 = vmul.f32 %v605, %v744
        %v769 = vmul.f32 %v606, %v744
        %v770 = vmul.f32 %v607, %v745
        %v771 = vmul.f32 %v608, %v745
        %v772 = vmul.f32 %v609, %v746
        %v773 = vmul.f32 %v610, %v746
        %v774 = vmul.f32 %v611, %v747
        %v775 = vmul.f32 %v612, %v747
        %v776 = vmul.f32 %v613, %v748
        %v777 = vmul.f32 %v614, %v748
        %v778 = vmul.f32 %v615, %v749
        %v779 = vmul.f32 %v616, %v749
        %v780 = vmul.f32 %v617, %v750
        %v781 = vmul.f32 %v618, %v750
        %v782 = vmul.f32 %v619, %v751
        %v783 = vmul.f32 %v620, %v751
        %v785 = vlaneseq
        %v786 = vshrl.u32 %v785, 7
        %v787 = vsub.s32 0, %v786
        %v788 = vrot.slane %v621, %v787
        %v789 = vlaneseq
        %v790 = vshrl.u32 %v789, 7
        %v791 = vsub.s32 1, %v790
        %v792 = vrot.slane %v621, %v791
        %v795 = vmul.f32 %v752, %v788
        %v796 = vmul.f32 %v753, %v792
        %v797 = vmul.f32 %v754, %v788
        %v798 = vmul.f32 %v755, %v792
        %v799 = vmul.f32 %v756, %v788
        %v800 = vmul.f32 %v757, %v792
        %v801 = vmul.f32 %v758, %v788
        %v802 = vmul.f32 %v759, %v792
        %v803 = vmul.f32 %v760, %v788
        %v804 = vmul.f32 %v761, %v792
        %v805 = vmul.f32 %v762, %v788
        %v806 = vmul.f32 %v763, %v792
        %v807 = vmul.f32 %v764, %v788
        %v808 = vmul.f32 %v765, %v792
        %v809 = vmul.f32 %v766, %v788
        %v810 = vmul.f32 %v767, %v792
        %v811 = vmul.f32 %v768, %v788
        %v812 = vmul.f32 %v769, %v792
        %v813 = vmul.f32 %v770, %v788
        %v814 = vmul.f32 %v771, %v792
        %v815 = vmul.f32 %v772, %v788
        %v816 = vmul.f32 %v773, %v792
        %v817 = vmul.f32 %v774, %v788
        %v818 = vmul.f32 %v775, %v792
        %v819 = vmul.f32 %v776, %v788
        %v820 = vmul.f32 %v777, %v792
        %v821 = vmul.f32 %v778, %v788
        %v822 = vmul.f32 %v779, %v792
        %v823 = vmul.f32 %v780, %v788
        %v824 = vmul.f32 %v781, %v792
        %v825 = vmul.f32 %v782, %v788
        %v826 = vmul.f32 %v783, %v792
        %v828 = vlaneseq
        %v829 = vshrl.u32 %v828, 7
        %v830 = vsub.s32 0, %v829
        %v831 = vrot.slane %v622, %v830
        %v832 = vlaneseq
        %v833 = vshrl.u32 %v832, 7
        %v834 = vsub.s32 1, %v833
        %v835 = vrot.slane %v622, %v834
        %v838 = vadd.f32 %v795, %v831
        %v839 = vadd.f32 %v796, %v835
        %v840 = vadd.f32 %v797, %v831
        %v841 = vadd.f32 %v798, %v835
        %v842 = vadd.f32 %v799, %v831
        %v843 = vadd.f32 %v800, %v835
        %v844 = vadd.f32 %v801, %v831
        %v845 = vadd.f32 %v802, %v835
        %v846 = vadd.f32 %v803, %v831
        %v847 = vadd.f32 %v804, %v835
        %v848 = vadd.f32 %v805, %v831
        %v849 = vadd.f32 %v806, %v835
        %v850 = vadd.f32 %v807, %v831
        %v851 = vadd.f32 %v808, %v835
        %v852 = vadd.f32 %v809, %v831
        %v853 = vadd.f32 %v810, %v835
        %v854 = vadd.f32 %v811, %v831
        %v855 = vadd.f32 %v812, %v835
        %v856 = vadd.f32 %v813, %v831
        %v857 = vadd.f32 %v814, %v835
        %v858 = vadd.f32 %v815, %v831
        %v859 = vadd.f32 %v816, %v835
        %v860 = vadd.f32 %v817, %v831
        %v861 = vadd.f32 %v818, %v835
        %v862 = vadd.f32 %v819, %v831
        %v863 = vadd.f32 %v820, %v835
        %v864 = vadd.f32 %v821, %v831
        %v865 = vadd.f32 %v822, %v835
        %v866 = vadd.f32 %v823, %v831
        %v867 = vadd.f32 %v824, %v835
        %v868 = vadd.f32 %v825, %v831
        %v869 = vadd.f32 %v826, %v835
        %v870 = vld [vmem:[#allocation7] sm:$0xff]
        %v871 = vld [vmem:[#allocation7 + $0x8] sm:$0xff]
        %v872 = vld [vmem:[#allocation7 + $0x10] sm:$0xff]
        %v873 = vld [vmem:[#allocation7 + $0x18] sm:$0xff]
        %v874 = vld [vmem:[#allocation7 + $0x20] sm:$0xff]
        %v875 = vld [vmem:[#allocation7 + $0x28] sm:$0xff]
        %v876 = vld [vmem:[#allocation7 + $0x30] sm:$0xff]
        %v877 = vld [vmem:[#allocation7 + $0x38] sm:$0xff]
        %v878 = vld [vmem:[#allocation7 + $0x40] sm:$0xff]
        %v879 = vld [vmem:[#allocation7 + $0x48] sm:$0xff]
        %v880 = vld [vmem:[#allocation7 + $0x50] sm:$0xff]
        %v881 = vld [vmem:[#allocation7 + $0x58] sm:$0xff]
        %v882 = vld [vmem:[#allocation7 + $0x60] sm:$0xff]
        %v883 = vld [vmem:[#allocation7 + $0x68] sm:$0xff]
        %v884 = vld [vmem:[#allocation7 + $0x70] sm:$0xff]
        %v885 = vld [vmem:[#allocation7 + $0x78] sm:$0xff]
        %v886 = vld [vmem:[#allocation7 + $0x80] sm:$0xff]
        %v887 = vld [vmem:[#allocation7 + $0x88] sm:$0xff]
        %v888 = vld [vmem:[#allocation7 + $0x90] sm:$0xff]
        %v889 = vld [vmem:[#allocation7 + $0x98] sm:$0xff]
        %v890 = vld [vmem:[#allocation7 + $0xa0] sm:$0xff]
        %v891 = vld [vmem:[#allocation7 + $0xa8] sm:$0xff]
        %v892 = vld [vmem:[#allocation7 + $0xb0] sm:$0xff]
        %v893 = vld [vmem:[#allocation7 + $0xb8] sm:$0xff]
        %v894 = vld [vmem:[#allocation7 + $0xc0] sm:$0xff]
        %v895 = vld [vmem:[#allocation7 + $0xc8] sm:$0xff]
        %v896 = vld [vmem:[#allocation7 + $0xd0] sm:$0xff]
        %v897 = vld [vmem:[#allocation7 + $0xd8] sm:$0xff]
        %v898 = vld [vmem:[#allocation7 + $0xe0] sm:$0xff]
        %v899 = vld [vmem:[#allocation7 + $0xe8] sm:$0xff]
        %v900 = vld [vmem:[#allocation7 + $0xf0] sm:$0xff]
        %v901 = vld [vmem:[#allocation7 + $0xf8] sm:$0xff]
        %v902 = vld [vmem:[#allocation7 + $0x100] sm:$0xff]
        %v903 = vld [vmem:[#allocation7 + $0x108] sm:$0xff]
        %v904 = vld [vmem:[#allocation7 + $0x110] sm:$0xff]
        %v905 = vld [vmem:[#allocation7 + $0x118] sm:$0xff]
        %v906 = vld [vmem:[#allocation7 + $0x120] sm:$0xff]
        %v907 = vld [vmem:[#allocation7 + $0x128] sm:$0xff]
        %v908 = vld [vmem:[#allocation7 + $0x130] sm:$0xff]
        %v909 = vld [vmem:[#allocation7 + $0x138] sm:$0xff]
        %v910 = vld [vmem:[#allocation7 + $0x140] sm:$0xff]
        %v911 = vld [vmem:[#allocation7 + $0x148] sm:$0xff]
        %v912 = vld [vmem:[#allocation7 + $0x150] sm:$0xff]
        %v913 = vld [vmem:[#allocation7 + $0x158] sm:$0xff]
        %v914 = vld [vmem:[#allocation7 + $0x160] sm:$0xff]
        %v915 = vld [vmem:[#allocation7 + $0x168] sm:$0xff]
        %v916 = vld [vmem:[#allocation7 + $0x170] sm:$0xff]
        %v917 = vld [vmem:[#allocation7 + $0x178] sm:$0xff]
        %v918 = vld [vmem:[#allocation7 + $0x180] sm:$0xff]
        %v919 = vld [vmem:[#allocation7 + $0x188] sm:$0xff]
        %v920 = vld [vmem:[#allocation7 + $0x190] sm:$0xff]
        %v921 = vld [vmem:[#allocation7 + $0x198] sm:$0xff]
        %v922 = vld [vmem:[#allocation7 + $0x1a0] sm:$0xff]
        %v923 = vld [vmem:[#allocation7 + $0x1a8] sm:$0xff]
        %v924 = vld [vmem:[#allocation7 + $0x1b0] sm:$0xff]
        %v925 = vld [vmem:[#allocation7 + $0x1b8] sm:$0xff]
        %v926 = vld [vmem:[#allocation7 + $0x1c0] sm:$0xff]
        %v927 = vld [vmem:[#allocation7 + $0x1c8] sm:$0xff]
        %v928 = vld [vmem:[#allocation7 + $0x1d0] sm:$0xff]
        %v929 = vld [vmem:[#allocation7 + $0x1d8] sm:$0xff]
        %v930 = vld [vmem:[#allocation7 + $0x1e0] sm:$0xff]
        %v931 = vld [vmem:[#allocation7 + $0x1e8] sm:$0xff]
        %v932 = vld [vmem:[#allocation7 + $0x1f0] sm:$0xff]
        %v933 = vld [vmem:[#allocation7 + $0x1f8] sm:$0xff]
        %934 = vmatprep.subr.mxu0 %v901
        %935 = vmatpush1.msra.mxu0 %v900
        %936 = vmatprep.subr.mxu0 %v899
        %937 = vmatpush1.msra.mxu0 %v898
        %938 = vmatprep.subr.mxu0 %v897
        %939 = vmatpush1.msra.mxu0 %v896
        %940 = vmatprep.subr.mxu0 %v895
        %941 = vmatpush1.msra.mxu0 %v894
        %942 = vmatprep.subr.mxu0 %v893
        %943 = vmatpush1.msra.mxu0 %v892
        %944 = vmatprep.subr.mxu0 %v891
        %945 = vmatpush1.msra.mxu0 %v890
        %946 = vmatprep.subr.mxu0 %v889
        %947 = vmatpush1.msra.mxu0 %v888
        %948 = vmatprep.subr.mxu0 %v887
        %949 = vmatpush1.msra.mxu0 %v886
        %950 = vmatprep.subr.mxu0 %v885
        %951 = vmatpush1.msra.mxu0 %v884
        %952 = vmatprep.subr.mxu0 %v883
        %953 = vmatpush1.msra.mxu0 %v882
        %954 = vmatprep.subr.mxu0 %v881
        %955 = vmatpush1.msra.mxu0 %v880
        %956 = vmatprep.subr.mxu0 %v879
        %957 = vmatpush1.msra.mxu0 %v878
        %958 = vmatprep.subr.mxu0 %v877
        %959 = vmatpush1.msra.mxu0 %v876
        %960 = vmatprep.subr.mxu0 %v875
        %961 = vmatpush1.msra.mxu0 %v874
        %962 = vmatprep.subr.mxu0 %v873
        %963 = vmatpush1.msra.mxu0 %v872
        %964 = vmatprep.subr.mxu0 %v871
        %965 = vmatpush1.msra.mxu0 %v870
        %966 = vmatprep.subr.mxu0 %v933
        %967 = vmatpush2.msra.mxu0 %v932
        %968 = vmatprep.subr.mxu0 %v931
        %969 = vmatpush2.msra.mxu0 %v930
        %970 = vmatprep.subr.mxu0 %v929
        %971 = vmatpush2.msra.mxu0 %v928
        %972 = vmatprep.subr.mxu0 %v927
        %973 = vmatpush2.msra.mxu0 %v926
        %974 = vmatprep.subr.mxu0 %v925
        %975 = vmatpush2.msra.mxu0 %v924
        %976 = vmatprep.subr.mxu0 %v923
        %977 = vmatpush2.msra.mxu0 %v922
        %978 = vmatprep.subr.mxu0 %v921
        %979 = vmatpush2.msra.mxu0 %v920
        %980 = vmatprep.subr.mxu0 %v919
        %981 = vmatpush2.msra.mxu0 %v918
        %982 = vmatprep.subr.mxu0 %v917
        %983 = vmatpush2.msra.mxu0 %v916
        %984 = vmatprep.subr.mxu0 %v915
        %985 = vmatpush2.msra.mxu0 %v914
        %986 = vmatprep.subr.mxu0 %v913
        %987 = vmatpush2.msra.mxu0 %v912
        %988 = vmatprep.subr.mxu0 %v911
        %989 = vmatpush2.msra.mxu0 %v910
        %990 = vmatprep.subr.mxu0 %v909
        %991 = vmatpush2.msra.mxu0 %v908
        %992 = vmatprep.subr.mxu0 %v907
        %993 = vmatpush2.msra.mxu0 %v906
        %994 = vmatprep.subr.mxu0 %v905
        %995 = vmatpush2.msra.mxu0 %v904
        %996 = vmatprep.subr.mxu0 %v903
        %997 = vmatpush2.msra.mxu0 %v902
        %998 = vmatprep.mubr.f32.mxu0 %v839
        %999 = vmatmul.mubr.f32.gmra.mxu0 %v838
        %v1000 = vpop.f32.mrf.mxu0
        %v1001 = vadd.f32 0.0, %v1000
        %v1002 = vpop.f32.mrf.mxu0
        %v1003 = vadd.f32 0.0, %v1002
        %1004 = vmatprep.mubr.f32.mxu0 %v841
        %1005 = vmatmul.mubr.f32.gmra.mxu0 %v840
        %v1006 = vpop.f32.mrf.mxu0
        %v1007 = vadd.f32 0.0, %v1006
        %v1008 = vpop.f32.mrf.mxu0
        %v1009 = vadd.f32 0.0, %v1008
        %1010 = vmatprep.mubr.f32.mxu0 %v843
        %1011 = vmatmul.mubr.f32.gmra.mxu0 %v842
        %v1012 = vpop.f32.mrf.mxu0
        %v1013 = vadd.f32 0.0, %v1012
        %v1014 = vpop.f32.mrf.mxu0
        %v1015 = vadd.f32 0.0, %v1014
        %1016 = vmatprep.mubr.f32.mxu0 %v845
        %1017 = vmatmul.mubr.f32.gmra.mxu0 %v844
        %v1018 = vpop.f32.mrf.mxu0
        %v1019 = vadd.f32 0.0, %v1018
        %v1020 = vpop.f32.mrf.mxu0
        %v1021 = vadd.f32 0.0, %v1020
        %1022 = vmatprep.mubr.f32.mxu0 %v847
        %1023 = vmatmul.mubr.f32.gmra.mxu0 %v846
        %v1024 = vpop.f32.mrf.mxu0
        %v1025 = vadd.f32 0.0, %v1024
        %v1026 = vpop.f32.mrf.mxu0
        %v1027 = vadd.f32 0.0, %v1026
        %1028 = vmatprep.mubr.f32.mxu0 %v849
        %1029 = vmatmul.mubr.f32.gmra.mxu0 %v848
        %v1030 = vpop.f32.mrf.mxu0
        %v1031 = vadd.f32 0.0, %v1030
        %v1032 = vpop.f32.mrf.mxu0
        %v1033 = vadd.f32 0.0, %v1032
        %1034 = vmatprep.mubr.f32.mxu0 %v851
        %1035 = vmatmul.mubr.f32.gmra.mxu0 %v850
        %v1036 = vpop.f32.mrf.mxu0
        %v1037 = vadd.f32 0.0, %v1036
        %v1038 = vpop.f32.mrf.mxu0
        %v1039 = vadd.f32 0.0, %v1038
        %1040 = vmatprep.mubr.f32.mxu0 %v853
        %1041 = vmatmul.mubr.f32.gmra.mxu0 %v852
        %v1042 = vpop.f32.mrf.mxu0
        %v1043 = vadd.f32 0.0, %v1042
        %v1044 = vpop.f32.mrf.mxu0
        %v1045 = vadd.f32 0.0, %v1044
        %1046 = vmatprep.mubr.f32.mxu0 %v855
        %1047 = vmatmul.mubr.f32.gmra.mxu0 %v854
        %v1048 = vpop.f32.mrf.mxu0
        %v1049 = vadd.f32 0.0, %v1048
        %v1050 = vpop.f32.mrf.mxu0
        %v1051 = vadd.f32 0.0, %v1050
        %1052 = vmatprep.mubr.f32.mxu0 %v857
        %1053 = vmatmul.mubr.f32.gmra.mxu0 %v856
        %v1054 = vpop.f32.mrf.mxu0
        %v1055 = vadd.f32 0.0, %v1054
        %v1056 = vpop.f32.mrf.mxu0
        %v1057 = vadd.f32 0.0, %v1056
        %1058 = vmatprep.mubr.f32.mxu0 %v859
        %1059 = vmatmul.mubr.f32.gmra.mxu0 %v858
        %v1060 = vpop.f32.mrf.mxu0
        %v1061 = vadd.f32 0.0, %v1060
        %v1062 = vpop.f32.mrf.mxu0
        %v1063 = vadd.f32 0.0, %v1062
        %1064 = vmatprep.mubr.f32.mxu0 %v861
        %1065 = vmatmul.mubr.f32.gmra.mxu0 %v860
        %v1066 = vpop.f32.mrf.mxu0
        %v1067 = vadd.f32 0.0, %v1066
        %v1068 = vpop.f32.mrf.mxu0
        %v1069 = vadd.f32 0.0, %v1068
        %1070 = vmatprep.mubr.f32.mxu0 %v863
        %1071 = vmatmul.mubr.f32.gmra.mxu0 %v862
        %v1072 = vpop.f32.mrf.mxu0
        %v1073 = vadd.f32 0.0, %v1072
        %v1074 = vpop.f32.mrf.mxu0
        %v1075 = vadd.f32 0.0, %v1074
        %1076 = vmatprep.mubr.f32.mxu0 %v865
        %1077 = vmatmul.mubr.f32.gmra.mxu0 %v864
        %v1078 = vpop.f32.mrf.mxu0
        %v1079 = vadd.f32 0.0, %v1078
        %v1080 = vpop.f32.mrf.mxu0
        %v1081 = vadd.f32 0.0, %v1080
        %1082 = vmatprep.mubr.f32.mxu0 %v867
        %1083 = vmatmul.mubr.f32.gmra.mxu0 %v866
        %v1084 = vpop.f32.mrf.mxu0
        %v1085 = vadd.f32 0.0, %v1084
        %v1086 = vpop.f32.mrf.mxu0
        %v1087 = vadd.f32 0.0, %v1086
        %1088 = vmatprep.mubr.f32.mxu0 %v869
        %1089 = vmatmul.mubr.f32.gmra.mxu0 %v868
        %v1090 = vpop.f32.mrf.mxu0
        %v1091 = vadd.f32 0.0, %v1090
        %v1092 = vpop.f32.mrf.mxu0
        %v1093 = vadd.f32 0.0, %v1092
        %1094 = vdwg.mxu0
        %v1095 = vmul.f32 %v1001, 0.088388346
        %v1096 = vmul.f32 %v1003, 0.088388346
        %v1097 = vmul.f32 %v1007, 0.088388346
        %v1098 = vmul.f32 %v1009, 0.088388346
        %v1099 = vmul.f32 %v1013, 0.088388346
        %v1100 = vmul.f32 %v1015, 0.088388346
        %v1101 = vmul.f32 %v1019, 0.088388346
        %v1102 = vmul.f32 %v1021, 0.088388346
        %v1103 = vmul.f32 %v1025, 0.088388346
        %v1104 = vmul.f32 %v1027, 0.088388346
        %v1105 = vmul.f32 %v1031, 0.088388346
        %v1106 = vmul.f32 %v1033, 0.088388346
        %v1107 = vmul.f32 %v1037, 0.088388346
        %v1108 = vmul.f32 %v1039, 0.088388346
        %v1109 = vmul.f32 %v1043, 0.088388346
        %v1110 = vmul.f32 %v1045, 0.088388346
        %v1111 = vmul.f32 %v1049, 0.088388346
        %v1112 = vmul.f32 %v1051, 0.088388346
        %v1113 = vmul.f32 %v1055, 0.088388346
        %v1114 = vmul.f32 %v1057, 0.088388346
        %v1115 = vmul.f32 %v1061, 0.088388346
        %v1116 = vmul.f32 %v1063, 0.088388346
        %v1117 = vmul.f32 %v1067, 0.088388346
        %v1118 = vmul.f32 %v1069, 0.088388346
        %v1119 = vmul.f32 %v1073, 0.088388346
        %v1120 = vmul.f32 %v1075, 0.088388346
        %v1121 = vmul.f32 %v1079, 0.088388346
        %v1122 = vmul.f32 %v1081, 0.088388346
        %v1123 = vmul.f32 %v1085, 0.088388346
        %v1124 = vmul.f32 %v1087, 0.088388346
        %v1125 = vmul.f32 %v1091, 0.088388346
        %v1126 = vmul.f32 %v1093, 0.088388346
        %v1127 = vld [vmem:[#allocation8] sm:$0xff]
        %v1128 = vld [vmem:[#allocation8 + $0x8] sm:$0xff]
        %v1129 = vld [vmem:[#allocation8 + $0x10] sm:$0xff]
        %v1130 = vld [vmem:[#allocation8 + $0x18] sm:$0xff]
        %v1131 = vld [vmem:[#allocation8 + $0x20] sm:$0xff]
        %v1132 = vld [vmem:[#allocation8 + $0x28] sm:$0xff]
        %v1133 = vld [vmem:[#allocation8 + $0x30] sm:$0xff]
        %v1134 = vld [vmem:[#allocation8 + $0x38] sm:$0xff]
        %v1135 = vld [vmem:[#allocation8 + $0x40] sm:$0xff]
        %v1136 = vld [vmem:[#allocation8 + $0x48] sm:$0xff]
        %v1137 = vld [vmem:[#allocation8 + $0x50] sm:$0xff]
        %v1138 = vld [vmem:[#allocation8 + $0x58] sm:$0xff]
        %v1139 = vld [vmem:[#allocation8 + $0x60] sm:$0xff]
        %v1140 = vld [vmem:[#allocation8 + $0x68] sm:$0xff]
        %v1141 = vld [vmem:[#allocation8 + $0x70] sm:$0xff]
        %v1142 = vld [vmem:[#allocation8 + $0x78] sm:$0xff]
        %v1143 = vld [vmem:[#allocation8 + $0x80] sm:$0xff]
        %v1144 = vld [vmem:[#allocation8 + $0x88] sm:$0xff]
        %v1145 = vld [vmem:[#allocation8 + $0x90] sm:$0xff]
        %v1146 = vld [vmem:[#allocation8 + $0x98] sm:$0xff]
        %v1147 = vld [vmem:[#allocation8 + $0xa0] sm:$0xff]
        %v1148 = vld [vmem:[#allocation8 + $0xa8] sm:$0xff]
        %v1149 = vld [vmem:[#allocation8 + $0xb0] sm:$0xff]
        %v1150 = vld [vmem:[#allocation8 + $0xb8] sm:$0xff]
        %v1151 = vld [vmem:[#allocation8 + $0xc0] sm:$0xff]
        %v1152 = vld [vmem:[#allocation8 + $0xc8] sm:$0xff]
        %v1153 = vld [vmem:[#allocation8 + $0xd0] sm:$0xff]
        %v1154 = vld [vmem:[#allocation8 + $0xd8] sm:$0xff]
        %v1155 = vld [vmem:[#allocation8 + $0xe0] sm:$0xff]
        %v1156 = vld [vmem:[#allocation8 + $0xe8] sm:$0xff]
        %v1157 = vld [vmem:[#allocation8 + $0xf0] sm:$0xff]
        %v1158 = vld [vmem:[#allocation8 + $0xf8] sm:$0xff]
        %v1159 = vld [vmem:[#allocation8 + $0x100] sm:$0xff]
        %v1160 = vld [vmem:[#allocation8 + $0x108] sm:$0xff]
        %v1161 = vld [vmem:[#allocation8 + $0x110] sm:$0xff]
        %v1162 = vld [vmem:[#allocation8 + $0x118] sm:$0xff]
        %v1163 = vld [vmem:[#allocation8 + $0x120] sm:$0xff]
        %v1164 = vld [vmem:[#allocation8 + $0x128] sm:$0xff]
        %v1165 = vld [vmem:[#allocation8 + $0x130] sm:$0xff]
        %v1166 = vld [vmem:[#allocation8 + $0x138] sm:$0xff]
        %v1167 = vld [vmem:[#allocation8 + $0x140] sm:$0xff]
        %v1168 = vld [vmem:[#allocation8 + $0x148] sm:$0xff]
        %v1169 = vld [vmem:[#allocation8 + $0x150] sm:$0xff]
        %v1170 = vld [vmem:[#allocation8 + $0x158] sm:$0xff]
        %v1171 = vld [vmem:[#allocation8 + $0x160] sm:$0xff]
        %v1172 = vld [vmem:[#allocation8 + $0x168] sm:$0xff]
        %v1173 = vld [vmem:[#allocation8 + $0x170] sm:$0xff]
        %v1174 = vld [vmem:[#allocation8 + $0x178] sm:$0xff]
        %v1175 = vld [vmem:[#allocation8 + $0x180] sm:$0xff]
        %v1176 = vld [vmem:[#allocation8 + $0x188] sm:$0xff]
        %v1177 = vld [vmem:[#allocation8 + $0x190] sm:$0xff]
        %v1178 = vld [vmem:[#allocation8 + $0x198] sm:$0xff]
        %v1179 = vld [vmem:[#allocation8 + $0x1a0] sm:$0xff]
        %v1180 = vld [vmem:[#allocation8 + $0x1a8] sm:$0xff]
        %v1181 = vld [vmem:[#allocation8 + $0x1b0] sm:$0xff]
        %v1182 = vld [vmem:[#allocation8 + $0x1b8] sm:$0xff]
        %v1183 = vld [vmem:[#allocation8 + $0x1c0] sm:$0xff]
        %v1184 = vld [vmem:[#allocation8 + $0x1c8] sm:$0xff]
        %v1185 = vld [vmem:[#allocation8 + $0x1d0] sm:$0xff]
        %v1186 = vld [vmem:[#allocation8 + $0x1d8] sm:$0xff]
        %v1187 = vld [vmem:[#allocation8 + $0x1e0] sm:$0xff]
        %v1188 = vld [vmem:[#allocation8 + $0x1e8] sm:$0xff]
        %v1189 = vld [vmem:[#allocation8 + $0x1f0] sm:$0xff]
        %v1190 = vld [vmem:[#allocation8 + $0x1f8] sm:$0xff]
        %1191 = vmatprep.subr.mxu0 %v1158
        %1192 = vmatpush1.msra.mxu0 %v1157
        %1193 = vmatprep.subr.mxu0 %v1156
        %1194 = vmatpush1.msra.mxu0 %v1155
        %1195 = vmatprep.subr.mxu0 %v1154
        %1196 = vmatpush1.msra.mxu0 %v1153
        %1197 = vmatprep.subr.mxu0 %v1152
        %1198 = vmatpush1.msra.mxu0 %v1151
        %1199 = vmatprep.subr.mxu0 %v1150
        %1200 = vmatpush1.msra.mxu0 %v1149
        %1201 = vmatprep.subr.mxu0 %v1148
        %1202 = vmatpush1.msra.mxu0 %v1147
        %1203 = vmatprep.subr.mxu0 %v1146
        %1204 = vmatpush1.msra.mxu0 %v1145
        %1205 = vmatprep.subr.mxu0 %v1144
        %1206 = vmatpush1.msra.mxu0 %v1143
        %1207 = vmatprep.subr.mxu0 %v1142
        %1208 = vmatpush1.msra.mxu0 %v1141
        %1209 = vmatprep.subr.mxu0 %v1140
        %1210 = vmatpush1.msra.mxu0 %v1139
        %1211 = vmatprep.subr.mxu0 %v1138
        %1212 = vmatpush1.msra.mxu0 %v1137
        %1213 = vmatprep.subr.mxu0 %v1136
        %1214 = vmatpush1.msra.mxu0 %v1135
        %1215 = vmatprep.subr.mxu0 %v1134
        %1216 = vmatpush1.msra.mxu0 %v1133
        %1217 = vmatprep.subr.mxu0 %v1132
        %1218 = vmatpush1.msra.mxu0 %v1131
        %1219 = vmatprep.subr.mxu0 %v1130
        %1220 = vmatpush1.msra.mxu0 %v1129
        %1221 = vmatprep.subr.mxu0 %v1128
        %1222 = vmatpush1.msra.mxu0 %v1127
        %1223 = vmatprep.subr.mxu0 %v1190
        %1224 = vmatpush2.msra.mxu0 %v1189
        %1225 = vmatprep.subr.mxu0 %v1188
        %1226 = vmatpush2.msra.mxu0 %v1187
        %1227 = vmatprep.subr.mxu0 %v1186
        %1228 = vmatpush2.msra.mxu0 %v1185
        %1229 = vmatprep.subr.mxu0 %v1184
        %1230 = vmatpush2.msra.mxu0 %v1183
        %1231 = vmatprep.subr.mxu0 %v1182
        %1232 = vmatpush2.msra.mxu0 %v1181
        %1233 = vmatprep.subr.mxu0 %v1180
        %1234 = vmatpush2.msra.mxu0 %v1179
        %1235 = vmatprep.subr.mxu0 %v1178
        %1236 = vmatpush2.msra.mxu0 %v1177
        %1237 = vmatprep.subr.mxu0 %v1176
        %1238 = vmatpush2.msra.mxu0 %v1175
        %1239 = vmatprep.subr.mxu0 %v1174
        %1240 = vmatpush2.msra.mxu0 %v1173
        %1241 = vmatprep.subr.mxu0 %v1172
        %1242 = vmatpush2.msra.mxu0 %v1171
        %1243 = vmatprep.subr.mxu0 %v1170
        %1244 = vmatpush2.msra.mxu0 %v1169
        %1245 = vmatprep.subr.mxu0 %v1168
        %1246 = vmatpush2.msra.mxu0 %v1167
        %1247 = vmatprep.subr.mxu0 %v1166
        %1248 = vmatpush2.msra.mxu0 %v1165
        %1249 = vmatprep.subr.mxu0 %v1164
        %1250 = vmatpush2.msra.mxu0 %v1163
        %1251 = vmatprep.subr.mxu0 %v1162
        %1252 = vmatpush2.msra.mxu0 %v1161
        %1253 = vmatprep.subr.mxu0 %v1160
        %1254 = vmatpush2.msra.mxu0 %v1159
        %1255 = vmatprep.mubr.f32.mxu0 %v839
        %1256 = vmatmul.mubr.f32.gmra.mxu0 %v838
        %v1257 = vpop.f32.mrf.mxu0
        %v1258 = vadd.f32 0.0, %v1257
        %v1259 = vpop.f32.mrf.mxu0
        %v1260 = vadd.f32 0.0, %v1259
        %1261 = vmatprep.mubr.f32.mxu0 %v841
        %1262 = vmatmul.mubr.f32.gmra.mxu0 %v840
        %v1263 = vpop.f32.mrf.mxu0
        %v1264 = vadd.f32 0.0, %v1263
        %v1265 = vpop.f32.mrf.mxu0
        %v1266 = vadd.f32 0.0, %v1265
        %1267 = vmatprep.mubr.f32.mxu0 %v843
        %1268 = vmatmul.mubr.f32.gmra.mxu0 %v842
        %v1269 = vpop.f32.mrf.mxu0
        %v1270 = vadd.f32 0.0, %v1269
        %v1271 = vpop.f32.mrf.mxu0
        %v1272 = vadd.f32 0.0, %v1271
        %1273 = vmatprep.mubr.f32.mxu0 %v845
        %1274 = vmatmul.mubr.f32.gmra.mxu0 %v844
        %v1275 = vpop.f32.mrf.mxu0
        %v1276 = vadd.f32 0.0, %v1275
        %v1277 = vpop.f32.mrf.mxu0
        %v1278 = vadd.f32 0.0, %v1277
        %1279 = vmatprep.mubr.f32.mxu0 %v847
        %1280 = vmatmul.mubr.f32.gmra.mxu0 %v846
        %v1281 = vpop.f32.mrf.mxu0
        %v1282 = vadd.f32 0.0, %v1281
        %v1283 = vpop.f32.mrf.mxu0
        %v1284 = vadd.f32 0.0, %v1283
        %1285 = vmatprep.mubr.f32.mxu0 %v849
        %1286 = vmatmul.mubr.f32.gmra.mxu0 %v848
        %v1287 = vpop.f32.mrf.mxu0
        %v1288 = vadd.f32 0.0, %v1287
        %v1289 = vpop.f32.mrf.mxu0
        %v1290 = vadd.f32 0.0, %v1289
        %1291 = vmatprep.mubr.f32.mxu0 %v851
        %1292 = vmatmul.mubr.f32.gmra.mxu0 %v850
        %v1293 = vpop.f32.mrf.mxu0
        %v1294 = vadd.f32 0.0, %v1293
        %v1295 = vpop.f32.mrf.mxu0
        %v1296 = vadd.f32 0.0, %v1295
        %1297 = vmatprep.mubr.f32.mxu0 %v853
        %1298 = vmatmul.mubr.f32.gmra.mxu0 %v852
        %v1299 = vpop.f32.mrf.mxu0
        %v1300 = vadd.f32 0.0, %v1299
        %v1301 = vpop.f32.mrf.mxu0
        %v1302 = vadd.f32 0.0, %v1301
        %1303 = vmatprep.mubr.f32.mxu0 %v855
        %1304 = vmatmul.mubr.f32.gmra.mxu0 %v854
        %v1305 = vpop.f32.mrf.mxu0
        %v1306 = vadd.f32 0.0, %v1305
        %v1307 = vpop.f32.mrf.mxu0
        %v1308 = vadd.f32 0.0, %v1307
        %1309 = vmatprep.mubr.f32.mxu0 %v857
        %1310 = vmatmul.mubr.f32.gmra.mxu0 %v856
        %v1311 = vpop.f32.mrf.mxu0
        %v1312 = vadd.f32 0.0, %v1311
        %v1313 = vpop.f32.mrf.mxu0
        %v1314 = vadd.f32 0.0, %v1313
        %1315 = vmatprep.mubr.f32.mxu0 %v859
        %1316 = vmatmul.mubr.f32.gmra.mxu0 %v858
        %v1317 = vpop.f32.mrf.mxu0
        %v1318 = vadd.f32 0.0, %v1317
        %v1319 = vpop.f32.mrf.mxu0
        %v1320 = vadd.f32 0.0, %v1319
        %1321 = vmatprep.mubr.f32.mxu0 %v861
        %1322 = vmatmul.mubr.f32.gmra.mxu0 %v860
        %v1323 = vpop.f32.mrf.mxu0
        %v1324 = vadd.f32 0.0, %v1323
        %v1325 = vpop.f32.mrf.mxu0
        %v1326 = vadd.f32 0.0, %v1325
        %1327 = vmatprep.mubr.f32.mxu0 %v863
        %1328 = vmatmul.mubr.f32.gmra.mxu0 %v862
        %v1329 = vpop.f32.mrf.mxu0
        %v1330 = vadd.f32 0.0, %v1329
        %v1331 = vpop.f32.mrf.mxu0
        %v1332 = vadd.f32 0.0, %v1331
        %1333 = vmatprep.mubr.f32.mxu0 %v865
        %1334 = vmatmul.mubr.f32.gmra.mxu0 %v864
        %v1335 = vpop.f32.mrf.mxu0
        %v1336 = vadd.f32 0.0, %v1335
        %v1337 = vpop.f32.mrf.mxu0
        %v1338 = vadd.f32 0.0, %v1337
        %1339 = vmatprep.mubr.f32.mxu0 %v867
        %1340 = vmatmul.mubr.f32.gmra.mxu0 %v866
        %v1341 = vpop.f32.mrf.mxu0
        %v1342 = vadd.f32 0.0, %v1341
        %v1343 = vpop.f32.mrf.mxu0
        %v1344 = vadd.f32 0.0, %v1343
        %1345 = vmatprep.mubr.f32.mxu0 %v869
        %1346 = vmatmul.mubr.f32.gmra.mxu0 %v868
        %v1347 = vpop.f32.mrf.mxu0
        %v1348 = vadd.f32 0.0, %v1347
        %v1349 = vpop.f32.mrf.mxu0
        %v1350 = vadd.f32 0.0, %v1349
        %1351 = vdwg.mxu0
        %v1352 = vld [vmem:[#allocation10] sm:$0xff]
        %v1353 = vld [vmem:[#allocation10 + $0x8] sm:$0xff]
        %v1354 = vld [vmem:[#allocation10 + $0x10] sm:$0xff]
        %v1355 = vld [vmem:[#allocation10 + $0x18] sm:$0xff]
        %v1356 = vld [vmem:[#allocation10 + $0x20] sm:$0xff]
        %v1357 = vld [vmem:[#allocation10 + $0x28] sm:$0xff]
        %v1358 = vld [vmem:[#allocation10 + $0x30] sm:$0xff]
        %v1359 = vld [vmem:[#allocation10 + $0x38] sm:$0xff]
        %v1360 = vld [vmem:[#allocation10 + $0x40] sm:$0xff]
        %v1361 = vld [vmem:[#allocation10 + $0x48] sm:$0xff]
        %v1362 = vld [vmem:[#allocation10 + $0x50] sm:$0xff]
        %v1363 = vld [vmem:[#allocation10 + $0x58] sm:$0xff]
        %v1364 = vld [vmem:[#allocation10 + $0x60] sm:$0xff]
        %v1365 = vld [vmem:[#allocation10 + $0x68] sm:$0xff]
        %v1366 = vld [vmem:[#allocation10 + $0x70] sm:$0xff]
        %v1367 = vld [vmem:[#allocation10 + $0x78] sm:$0xff]
        %v1368 = vld [vmem:[#allocation10 + $0x80] sm:$0xff]
        %v1369 = vld [vmem:[#allocation10 + $0x88] sm:$0xff]
        %v1370 = vld [vmem:[#allocation10 + $0x90] sm:$0xff]
        %v1371 = vld [vmem:[#allocation10 + $0x98] sm:$0xff]
        %v1372 = vld [vmem:[#allocation10 + $0xa0] sm:$0xff]
        %v1373 = vld [vmem:[#allocation10 + $0xa8] sm:$0xff]
        %v1374 = vld [vmem:[#allocation10 + $0xb0] sm:$0xff]
        %v1375 = vld [vmem:[#allocation10 + $0xb8] sm:$0xff]
        %v1376 = vld [vmem:[#allocation10 + $0xc0] sm:$0xff]
        %v1377 = vld [vmem:[#allocation10 + $0xc8] sm:$0xff]
        %v1378 = vld [vmem:[#allocation10 + $0xd0] sm:$0xff]
        %v1379 = vld [vmem:[#allocation10 + $0xd8] sm:$0xff]
        %v1380 = vld [vmem:[#allocation10 + $0xe0] sm:$0xff]
        %v1381 = vld [vmem:[#allocation10 + $0xe8] sm:$0xff]
        %v1382 = vld [vmem:[#allocation10 + $0xf0] sm:$0xff]
        %v1383 = vld [vmem:[#allocation10 + $0xf8] sm:$0xff]
        %v1384 = vld [vmem:[#allocation10 + $0x100] sm:$0xff]
        %v1385 = vld [vmem:[#allocation10 + $0x108] sm:$0xff]
        %v1386 = vld [vmem:[#allocation10 + $0x110] sm:$0xff]
        %v1387 = vld [vmem:[#allocation10 + $0x118] sm:$0xff]
        %v1388 = vld [vmem:[#allocation10 + $0x120] sm:$0xff]
        %v1389 = vld [vmem:[#allocation10 + $0x128] sm:$0xff]
        %v1390 = vld [vmem:[#allocation10 + $0x130] sm:$0xff]
        %v1391 = vld [vmem:[#allocation10 + $0x138] sm:$0xff]
        %v1392 = vld [vmem:[#allocation10 + $0x140] sm:$0xff]
        %v1393 = vld [vmem:[#allocation10 + $0x148] sm:$0xff]
        %v1394 = vld [vmem:[#allocation10 + $0x150] sm:$0xff]
        %v1395 = vld [vmem:[#allocation10 + $0x158] sm:$0xff]
        %v1396 = vld [vmem:[#allocation10 + $0x160] sm:$0xff]
        %v1397 = vld [vmem:[#allocation10 + $0x168] sm:$0xff]
        %v1398 = vld [vmem:[#allocation10 + $0x170] sm:$0xff]
        %v1399 = vld [vmem:[#allocation10 + $0x178] sm:$0xff]
        %v1400 = vld [vmem:[#allocation10 + $0x180] sm:$0xff]
        %v1401 = vld [vmem:[#allocation10 + $0x188] sm:$0xff]
        %v1402 = vld [vmem:[#allocation10 + $0x190] sm:$0xff]
        %v1403 = vld [vmem:[#allocation10 + $0x198] sm:$0xff]
        %v1404 = vld [vmem:[#allocation10 + $0x1a0] sm:$0xff]
        %v1405 = vld [vmem:[#allocation10 + $0x1a8] sm:$0xff]
        %v1406 = vld [vmem:[#allocation10 + $0x1b0] sm:$0xff]
        %v1407 = vld [vmem:[#allocation10 + $0x1b8] sm:$0xff]
        %v1408 = vld [vmem:[#allocation10 + $0x1c0] sm:$0xff]
        %v1409 = vld [vmem:[#allocation10 + $0x1c8] sm:$0xff]
        %v1410 = vld [vmem:[#allocation10 + $0x1d0] sm:$0xff]
        %v1411 = vld [vmem:[#allocation10 + $0x1d8] sm:$0xff]
        %v1412 = vld [vmem:[#allocation10 + $0x1e0] sm:$0xff]
        %v1413 = vld [vmem:[#allocation10 + $0x1e8] sm:$0xff]
        %v1414 = vld [vmem:[#allocation10 + $0x1f0] sm:$0xff]
        %v1415 = vld [vmem:[#allocation10 + $0x1f8] sm:$0xff]
        %1416 = vmatprep.subr.mxu0 %v1383
        %1417 = vmatpush1.msra.mxu0 %v1382
        %1418 = vmatprep.subr.mxu0 %v1381
        %1419 = vmatpush1.msra.mxu0 %v1380
        %1420 = vmatprep.subr.mxu0 %v1379
        %1421 = vmatpush1.msra.mxu0 %v1378
        %1422 = vmatprep.subr.mxu0 %v1377
        %1423 = vmatpush1.msra.mxu0 %v1376
        %1424 = vmatprep.subr.mxu0 %v1375
        %1425 = vmatpush1.msra.mxu0 %v1374
        %1426 = vmatprep.subr.mxu0 %v1373
        %1427 = vmatpush1.msra.mxu0 %v1372
        %1428 = vmatprep.subr.mxu0 %v1371
        %1429 = vmatpush1.msra.mxu0 %v1370
        %1430 = vmatprep.subr.mxu0 %v1369
        %1431 = vmatpush1.msra.mxu0 %v1368
        %1432 = vmatprep.subr.mxu0 %v1367
        %1433 = vmatpush1.msra.mxu0 %v1366
        %1434 = vmatprep.subr.mxu0 %v1365
        %1435 = vmatpush1.msra.mxu0 %v1364
        %1436 = vmatprep.subr.mxu0 %v1363
        %1437 = vmatpush1.msra.mxu0 %v1362
        %1438 = vmatprep.subr.mxu0 %v1361
        %1439 = vmatpush1.msra.mxu0 %v1360
        %1440 = vmatprep.subr.mxu0 %v1359
        %1441 = vmatpush1.msra.mxu0 %v1358
        %1442 = vmatprep.subr.mxu0 %v1357
        %1443 = vmatpush1.msra.mxu0 %v1356
        %1444 = vmatprep.subr.mxu0 %v1355
        %1445 = vmatpush1.msra.mxu0 %v1354
        %1446 = vmatprep.subr.mxu0 %v1353
        %1447 = vmatpush1.msra.mxu0 %v1352
        %1448 = vmatprep.subr.mxu0 %v1415
        %1449 = vmatpush2.msra.mxu0 %v1414
        %1450 = vmatprep.subr.mxu0 %v1413
        %1451 = vmatpush2.msra.mxu0 %v1412
        %1452 = vmatprep.subr.mxu0 %v1411
        %1453 = vmatpush2.msra.mxu0 %v1410
        %1454 = vmatprep.subr.mxu0 %v1409
        %1455 = vmatpush2.msra.mxu0 %v1408
        %1456 = vmatprep.subr.mxu0 %v1407
        %1457 = vmatpush2.msra.mxu0 %v1406
        %1458 = vmatprep.subr.mxu0 %v1405
        %1459 = vmatpush2.msra.mxu0 %v1404
        %1460 = vmatprep.subr.mxu0 %v1403
        %1461 = vmatpush2.msra.mxu0 %v1402
        %1462 = vmatprep.subr.mxu0 %v1401
        %1463 = vmatpush2.msra.mxu0 %v1400
        %1464 = vmatprep.subr.mxu0 %v1399
        %1465 = vmatpush2.msra.mxu0 %v1398
        %1466 = vmatprep.subr.mxu0 %v1397
        %1467 = vmatpush2.msra.mxu0 %v1396
        %1468 = vmatprep.subr.mxu0 %v1395
        %1469 = vmatpush2.msra.mxu0 %v1394
        %1470 = vmatprep.subr.mxu0 %v1393
        %1471 = vmatpush2.msra.mxu0 %v1392
        %1472 = vmatprep.subr.mxu0 %v1391
        %1473 = vmatpush2.msra.mxu0 %v1390
        %1474 = vmatprep.subr.mxu0 %v1389
        %1475 = vmatpush2.msra.mxu0 %v1388
        %1476 = vmatprep.subr.mxu0 %v1387
        %1477 = vmatpush2.msra.mxu0 %v1386
        %1478 = vmatprep.subr.mxu0 %v1385
        %1479 = vmatpush2.msra.mxu0 %v1384
        %1480 = vmatprep.mubr.f32.mxu0 %v839
        %1481 = vmatmul.mubr.f32.gmra.mxu0 %v838
        %v1482 = vpop.f32.mrf.mxu0
        %v1483 = vadd.f32 0.0, %v1482
        %v1484 = vpop.f32.mrf.mxu0
        %v1485 = vadd.f32 0.0, %v1484
        %1486 = vmatprep.mubr.f32.mxu0 %v841
        %1487 = vmatmul.mubr.f32.gmra.mxu0 %v840
        %v1488 = vpop.f32.mrf.mxu0
        %v1489 = vadd.f32 0.0, %v1488
        %v1490 = vpop.f32.mrf.mxu0
        %v1491 = vadd.f32 0.0, %v1490
        %1492 = vmatprep.mubr.f32.mxu0 %v843
        %1493 = vmatmul.mubr.f32.gmra.mxu0 %v842
        %v1494 = vpop.f32.mrf.mxu0
        %v1495 = vadd.f32 0.0, %v1494
        %v1496 = vpop.f32.mrf.mxu0
        %v1497 = vadd.f32 0.0, %v1496
        %1498 = vmatprep.mubr.f32.mxu0 %v845
        %1499 = vmatmul.mubr.f32.gmra.mxu0 %v844
        %v1500 = vpop.f32.mrf.mxu0
        %v1501 = vadd.f32 0.0, %v1500
        %v1502 = vpop.f32.mrf.mxu0
        %v1503 = vadd.f32 0.0, %v1502
        %1504 = vmatprep.mubr.f32.mxu0 %v847
        %1505 = vmatmul.mubr.f32.gmra.mxu0 %v846
        %v1506 = vpop.f32.mrf.mxu0
        %v1507 = vadd.f32 0.0, %v1506
        %v1508 = vpop.f32.mrf.mxu0
        %v1509 = vadd.f32 0.0, %v1508
        %1510 = vmatprep.mubr.f32.mxu0 %v849
        %1511 = vmatmul.mubr.f32.gmra.mxu0 %v848
        %v1512 = vpop.f32.mrf.mxu0
        %v1513 = vadd.f32 0.0, %v1512
        %v1514 = vpop.f32.mrf.mxu0
        %v1515 = vadd.f32 0.0, %v1514
        %1516 = vmatprep.mubr.f32.mxu0 %v851
        %1517 = vmatmul.mubr.f32.gmra.mxu0 %v850
        %v1518 = vpop.f32.mrf.mxu0
        %v1519 = vadd.f32 0.0, %v1518
        %v1520 = vpop.f32.mrf.mxu0
        %v1521 = vadd.f32 0.0, %v1520
        %1522 = vmatprep.mubr.f32.mxu0 %v853
        %1523 = vmatmul.mubr.f32.gmra.mxu0 %v852
        %v1524 = vpop.f32.mrf.mxu0
        %v1525 = vadd.f32 0.0, %v1524
        %v1526 = vpop.f32.mrf.mxu0
        %v1527 = vadd.f32 0.0, %v1526
        %1528 = vmatprep.mubr.f32.mxu0 %v855
        %1529 = vmatmul.mubr.f32.gmra.mxu0 %v854
        %v1530 = vpop.f32.mrf.mxu0
        %v1531 = vadd.f32 0.0, %v1530
        %v1532 = vpop.f32.mrf.mxu0
        %v1533 = vadd.f32 0.0, %v1532
        %1534 = vmatprep.mubr.f32.mxu0 %v857
        %1535 = vmatmul.mubr.f32.gmra.mxu0 %v856
        %v1536 = vpop.f32.mrf.mxu0
        %v1537 = vadd.f32 0.0, %v1536
        %v1538 = vpop.f32.mrf.mxu0
        %v1539 = vadd.f32 0.0, %v1538
        %1540 = vmatprep.mubr.f32.mxu0 %v859
        %1541 = vmatmul.mubr.f32.gmra.mxu0 %v858
        %v1542 = vpop.f32.mrf.mxu0
        %v1543 = vadd.f32 0.0, %v1542
        %v1544 = vpop.f32.mrf.mxu0
        %v1545 = vadd.f32 0.0, %v1544
        %1546 = vmatprep.mubr.f32.mxu0 %v861
        %1547 = vmatmul.mubr.f32.gmra.mxu0 %v860
        %v1548 = vpop.f32.mrf.mxu0
        %v1549 = vadd.f32 0.0, %v1548
        %v1550 = vpop.f32.mrf.mxu0
        %v1551 = vadd.f32 0.0, %v1550
        %1552 = vmatprep.mubr.f32.mxu0 %v863
        %1553 = vmatmul.mubr.f32.gmra.mxu0 %v862
        %v1554 = vpop.f32.mrf.mxu0
        %v1555 = vadd.f32 0.0, %v1554
        %v1556 = vpop.f32.mrf.mxu0
        %v1557 = vadd.f32 0.0, %v1556
        %1558 = vmatprep.mubr.f32.mxu0 %v865
        %1559 = vmatmul.mubr.f32.gmra.mxu0 %v864
        %v1560 = vpop.f32.mrf.mxu0
        %v1561 = vadd.f32 0.0, %v1560
        %v1562 = vpop.f32.mrf.mxu0
        %v1563 = vadd.f32 0.0, %v1562
        %1564 = vmatprep.mubr.f32.mxu0 %v867
        %1565 = vmatmul.mubr.f32.gmra.mxu0 %v866
        %v1566 = vpop.f32.mrf.mxu0
        %v1567 = vadd.f32 0.0, %v1566
        %v1568 = vpop.f32.mrf.mxu0
        %v1569 = vadd.f32 0.0, %v1568
        %1570 = vmatprep.mubr.f32.mxu0 %v869
        %1571 = vmatmul.mubr.f32.gmra.mxu0 %v868
        %v1572 = vpop.f32.mrf.mxu0
        %v1573 = vadd.f32 0.0, %v1572
        %v1574 = vpop.f32.mrf.mxu0
        %v1575 = vadd.f32 0.0, %v1574
        %1576 = vdwg.mxu0
        %1577 = vst [vmem:[%s497] sm:$0xff] %v1095
        %1578 = vst [vmem:[%s497 + $0x8] sm:$0xff] %v1096
        %1579 = vst [vmem:[%s497 + $0x10] sm:$0xff] %v1097
        %1580 = vst [vmem:[%s497 + $0x18] sm:$0xff] %v1098
        %1581 = vst [vmem:[%s497 + $0x20] sm:$0xff] %v1099
        %1582 = vst [vmem:[%s497 + $0x28] sm:$0xff] %v1100
        %1583 = vst [vmem:[%s497 + $0x30] sm:$0xff] %v1101
        %1584 = vst [vmem:[%s497 + $0x38] sm:$0xff] %v1102
        %1585 = vst [vmem:[%s497 + $0x40] sm:$0xff] %v1103
        %1586 = vst [vmem:[%s497 + $0x48] sm:$0xff] %v1104
        %1587 = vst [vmem:[%s497 + $0x50] sm:$0xff] %v1105
        %1588 = vst [vmem:[%s497 + $0x58] sm:$0xff] %v1106
        %1589 = vst [vmem:[%s497 + $0x60] sm:$0xff] %v1107
        %1590 = vst [vmem:[%s497 + $0x68] sm:$0xff] %v1108
        %1591 = vst [vmem:[%s497 + $0x70] sm:$0xff] %v1109
        %1592 = vst [vmem:[%s497 + $0x78] sm:$0xff] %v1110
        %1593 = vst [vmem:[%s497 + $0x80] sm:$0xff] %v1111
        %1594 = vst [vmem:[%s497 + $0x88] sm:$0xff] %v1112
        %1595 = vst [vmem:[%s497 + $0x90] sm:$0xff] %v1113
        %1596 = vst [vmem:[%s497 + $0x98] sm:$0xff] %v1114
        %1597 = vst [vmem:[%s497 + $0xa0] sm:$0xff] %v1115
        %1598 = vst [vmem:[%s497 + $0xa8] sm:$0xff] %v1116
        %1599 = vst [vmem:[%s497 + $0xb0] sm:$0xff] %v1117
        %1600 = vst [vmem:[%s497 + $0xb8] sm:$0xff] %v1118
        %1601 = vst [vmem:[%s497 + $0xc0] sm:$0xff] %v1119
        %1602 = vst [vmem:[%s497 + $0xc8] sm:$0xff] %v1120
        %1603 = vst [vmem:[%s497 + $0xd0] sm:$0xff] %v1121
        %1604 = vst [vmem:[%s497 + $0xd8] sm:$0xff] %v1122
        %1605 = vst [vmem:[%s497 + $0xe0] sm:$0xff] %v1123
        %1606 = vst [vmem:[%s497 + $0xe8] sm:$0xff] %v1124
        %1607 = vst [vmem:[%s497 + $0xf0] sm:$0xff] %v1125
        %1608 = vst [vmem:[%s497 + $0xf8] sm:$0xff] %v1126
        %1609 = vst [vmem:[%s504] sm:$0xff] %v1258
        %1610 = vst [vmem:[%s504 + $0x8] sm:$0xff] %v1260
        %1611 = vst [vmem:[%s504 + $0x10] sm:$0xff] %v1264
        %1612 = vst [vmem:[%s504 + $0x18] sm:$0xff] %v1266
        %1613 = vst [vmem:[%s504 + $0x20] sm:$0xff] %v1270
        %1614 = vst [vmem:[%s504 + $0x28] sm:$0xff] %v1272
        %1615 = vst [vmem:[%s504 + $0x30] sm:$0xff] %v1276
        %1616 = vst [vmem:[%s504 + $0x38] sm:$0xff] %v1278
        %1617 = vst [vmem:[%s504 + $0x40] sm:$0xff] %v1282
        %1618 = vst [vmem:[%s504 + $0x48] sm:$0xff] %v1284
        %1619 = vst [vmem:[%s504 + $0x50] sm:$0xff] %v1288
        %1620 = vst [vmem:[%s504 + $0x58] sm:$0xff] %v1290
        %1621 = vst [vmem:[%s504 + $0x60] sm:$0xff] %v1294
        %1622 = vst [vmem:[%s504 + $0x68] sm:$0xff] %v1296
        %1623 = vst [vmem:[%s504 + $0x70] sm:$0xff] %v1300
        %1624 = vst [vmem:[%s504 + $0x78] sm:$0xff] %v1302
        %1625 = vst [vmem:[%s504 + $0x80] sm:$0xff] %v1306
        %1626 = vst [vmem:[%s504 + $0x88] sm:$0xff] %v1308
        %1627 = vst [vmem:[%s504 + $0x90] sm:$0xff] %v1312
        %1628 = vst [vmem:[%s504 + $0x98] sm:$0xff] %v1314
        %1629 = vst [vmem:[%s504 + $0xa0] sm:$0xff] %v1318
        %1630 = vst [vmem:[%s504 + $0xa8] sm:$0xff] %v1320
        %1631 = vst [vmem:[%s504 + $0xb0] sm:$0xff] %v1324
        %1632 = vst [vmem:[%s504 + $0xb8] sm:$0xff] %v1326
        %1633 = vst [vmem:[%s504 + $0xc0] sm:$0xff] %v1330
        %1634 = vst [vmem:[%s504 + $0xc8] sm:$0xff] %v1332
        %1635 = vst [vmem:[%s504 + $0xd0] sm:$0xff] %v1336
        %1636 = vst [vmem:[%s504 + $0xd8] sm:$0xff] %v1338
        %1637 = vst [vmem:[%s504 + $0xe0] sm:$0xff] %v1342
        %1638 = vst [vmem:[%s504 + $0xe8] sm:$0xff] %v1344
        %1639 = vst [vmem:[%s504 + $0xf0] sm:$0xff] %v1348
        %1640 = vst [vmem:[%s504 + $0xf8] sm:$0xff] %v1350
        %1641 = vst [vmem:[%s511] sm:$0xff] %v1483
        %1642 = vst [vmem:[%s511 + $0x8] sm:$0xff] %v1485
        %1643 = vst [vmem:[%s511 + $0x10] sm:$0xff] %v1489
        %1644 = vst [vmem:[%s511 + $0x18] sm:$0xff] %v1491
        %1645 = vst [vmem:[%s511 + $0x20] sm:$0xff] %v1495
        %1646 = vst [vmem:[%s511 + $0x28] sm:$0xff] %v1497
        %1647 = vst [vmem:[%s511 + $0x30] sm:$0xff] %v1501
        %1648 = vst [vmem:[%s511 + $0x38] sm:$0xff] %v1503
        %1649 = vst [vmem:[%s511 + $0x40] sm:$0xff] %v1507
        %1650 = vst [vmem:[%s511 + $0x48] sm:$0xff] %v1509
        %1651 = vst [vmem:[%s511 + $0x50] sm:$0xff] %v1513
        %1652 = vst [vmem:[%s511 + $0x58] sm:$0xff] %v1515
        %1653 = vst [vmem:[%s511 + $0x60] sm:$0xff] %v1519
        %1654 = vst [vmem:[%s511 + $0x68] sm:$0xff] %v1521
        %1655 = vst [vmem:[%s511 + $0x70] sm:$0xff] %v1525
        %1656 = vst [vmem:[%s511 + $0x78] sm:$0xff] %v1527
        %1657 = vst [vmem:[%s511 + $0x80] sm:$0xff] %v1531
        %1658 = vst [vmem:[%s511 + $0x88] sm:$0xff] %v1533
        %1659 = vst [vmem:[%s511 + $0x90] sm:$0xff] %v1537
        %1660 = vst [vmem:[%s511 + $0x98] sm:$0xff] %v1539
        %1661 = vst [vmem:[%s511 + $0xa0] sm:$0xff] %v1543
        %1662 = vst [vmem:[%s511 + $0xa8] sm:$0xff] %v1545
        %1663 = vst [vmem:[%s511 + $0xb0] sm:$0xff] %v1549
        %1664 = vst [vmem:[%s511 + $0xb8] sm:$0xff] %v1551
        %1665 = vst [vmem:[%s511 + $0xc0] sm:$0xff] %v1555
        %1666 = vst [vmem:[%s511 + $0xc8] sm:$0xff] %v1557
        %1667 = vst [vmem:[%s511 + $0xd0] sm:$0xff] %v1561
        %1668 = vst [vmem:[%s511 + $0xd8] sm:$0xff] %v1563
        %1669 = vst [vmem:[%s511 + $0xe0] sm:$0xff] %v1567
        %1670 = vst [vmem:[%s511 + $0xe8] sm:$0xff] %v1569
        %1671 = vst [vmem:[%s511 + $0xf0] sm:$0xff] %v1573
        %1672 = vst [vmem:[%s511 + $0xf8] sm:$0xff] %v1575
        %1673 = vst [vmem:[%s518] sm:$0xff] %v589
        %1674 = vst [vmem:[%s518 + $0x8] sm:$0xff] %v590
        %1675 = vst [vmem:[%s518 + $0x10] sm:$0xff] %v591
        %1676 = vst [vmem:[%s518 + $0x18] sm:$0xff] %v592
        %1677 = vst [vmem:[%s518 + $0x20] sm:$0xff] %v593
        %1678 = vst [vmem:[%s518 + $0x28] sm:$0xff] %v594
        %1679 = vst [vmem:[%s518 + $0x30] sm:$0xff] %v595
        %1680 = vst [vmem:[%s518 + $0x38] sm:$0xff] %v596
        %1681 = vst [vmem:[%s518 + $0x40] sm:$0xff] %v597
        %1682 = vst [vmem:[%s518 + $0x48] sm:$0xff] %v598
        %1683 = vst [vmem:[%s518 + $0x50] sm:$0xff] %v599
        %1684 = vst [vmem:[%s518 + $0x58] sm:$0xff] %v600
        %1685 = vst [vmem:[%s518 + $0x60] sm:$0xff] %v601
        %1686 = vst [vmem:[%s518 + $0x68] sm:$0xff] %v602
        %1687 = vst [vmem:[%s518 + $0x70] sm:$0xff] %v603
        %1688 = vst [vmem:[%s518 + $0x78] sm:$0xff] %v604
        %1689 = vst [vmem:[%s518 + $0x80] sm:$0xff] %v605
        %1690 = vst [vmem:[%s518 + $0x88] sm:$0xff] %v606
        %1691 = vst [vmem:[%s518 + $0x90] sm:$0xff] %v607
        %1692 = vst [vmem:[%s518 + $0x98] sm:$0xff] %v608
        %1693 = vst [vmem:[%s518 + $0xa0] sm:$0xff] %v609
        %1694 = vst [vmem:[%s518 + $0xa8] sm:$0xff] %v610
        %1695 = vst [vmem:[%s518 + $0xb0] sm:$0xff] %v611
        %1696 = vst [vmem:[%s518 + $0xb8] sm:$0xff] %v612
        %1697 = vst [vmem:[%s518 + $0xc0] sm:$0xff] %v613
        %1698 = vst [vmem:[%s518 + $0xc8] sm:$0xff] %v614
        %1699 = vst [vmem:[%s518 + $0xd0] sm:$0xff] %v615
        %1700 = vst [vmem:[%s518 + $0xd8] sm:$0xff] %v616
        %1701 = vst [vmem:[%s518 + $0xe0] sm:$0xff] %v617
        %1702 = vst [vmem:[%s518 + $0xe8] sm:$0xff] %v618
        %1703 = vst [vmem:[%s518 + $0xf0] sm:$0xff] %v619
        %1704 = vst [vmem:[%s518 + $0xf8] sm:$0xff] %v620
        %s1705 = sand.u32 %s221, 1
        %s1706 = scalar_lea.sflag [#allocation4], %s1705
        %s1707 = sand.u32 %s221, 1
        %s1708 = smul.addr %s1707, 256
        %s1709 = scalar_lea.vmem [#allocation11], %s1708
        %s1710 = sand.u32 %s38, 1
        %s1711 = scalar_lea.sflag [#allocation13], %s1710
        %s1712 = sand.u32 %s249, 1
        %s1713 = smul.addr %s1712, 256
        %s1714 = scalar_lea.vmem [#allocation12], %s1713
        %s1715 = sand.u32 %s38, 1
        %s1716 = scalar_lea.sflag [#allocation13], %s1715
        %s1717 = sand.u32 %s277, 1
        %s1718 = smul.addr %s1717, 256
        %s1719 = scalar_lea.vmem [#allocation14], %s1718
        %s1720 = sand.u32 %s305, 1
        %s1721 = scalar_lea.sflag [#allocation16], %s1720
        %s1722 = sand.u32 %s305, 1
        %s1723 = smul.addr %s1722, 256
        %s1724 = scalar_lea.vmem [#allocation15], %s1723
        // Predicated region
        $region69: #{tpu_custom_call.1} parent=47 // pred_check
          %p1725 = pneg %p231
        $region70: #{tpu_custom_call.1} parent=47 // pred_check_branch
          %1727 = sbr.rel (%p1725) target = $region72
        $region71: #{tpu_custom_call.1} parent=47 // pred_region
          %s1728 = smul.u32 16, %s43
          %s1730 = ssub.s32 4096, 4096
          %1731 = vsyncadd %s1706, %s1730
          %s1732 = smul.addr %s1728, 2
          %s1733 = smul.addr %s42, 64
          %s1734 = sadd.s32 %s1732, %s1733
          %s1735 = smul.addr %s1734, 128
          %s1736 = scalar_lea.hbm %s7, %s1735
          %s1737 = sshll.u32 %s1709, 4
          %s1738 = int_to_ptr.vmem [resolvable:$true] %s1737
          %1743 = dma.vmem_to_hbm [thread:$0]  %s1738, 4096, %s1736, %s1706, 256, 256, 16
        $region72: #{tpu_custom_call.1} parent=47 // pred_fallthru
          _
        // Predicated region
        $region73: #{tpu_custom_call.1} parent=47 // pred_check
          %p1744 = pneg %p259
        $region74: #{tpu_custom_call.1} parent=47 // pred_check_branch
          %1746 = sbr.rel (%p1744) target = $region76
        $region75: #{tpu_custom_call.1} parent=47 // pred_region
          %s1747 = smul.u32 16, %s43
          %s1749 = ssub.s32 4096, 4096
          %1750 = vsyncadd %s1711, %s1749
          %s1751 = smul.addr %s1747, 2
          %s1752 = smul.addr %s42, 64
          %s1753 = sadd.s32 %s1751, %s1752
          %s1754 = smul.addr %s1753, 128
          %s1755 = scalar_lea.hbm %s8, %s1754
          %s1756 = sshll.u32 %s1714, 4
          %s1757 = int_to_ptr.vmem [resolvable:$true] %s1756
          %1762 = dma.vmem_to_hbm [thread:$0]  %s1757, 4096, %s1755, %s1711, 256, 256, 16
        $region76: #{tpu_custom_call.1} parent=47 // pred_fallthru
          _
        // Predicated region
        $region77: #{tpu_custom_call.1} parent=47 // pred_check
          %p1763 = pneg %p287
        $region78: #{tpu_custom_call.1} parent=47 // pred_check_branch
          %1765 = sbr.rel (%p1763) target = $region80
        $region79: #{tpu_custom_call.1} parent=47 // pred_region
          %s1766 = smul.u32 16, %s43
          %s1768 = ssub.s32 4096, 4096
          %1769 = vsyncadd %s1716, %s1768
          %s1770 = smul.addr %s1766, 2
          %s1771 = smul.addr %s42, 64
          %s1772 = sadd.s32 %s1770, %s1771
          %s1773 = smul.addr %s1772, 128
          %s1774 = scalar_lea.hbm %s9, %s1773
          %s1775 = sshll.u32 %s1719, 4
          %s1776 = int_to_ptr.vmem [resolvable:$true] %s1775
          %1781 = dma.vmem_to_hbm [thread:$0]  %s1776, 4096, %s1774, %s1716, 256, 256, 16
        $region80: #{tpu_custom_call.1} parent=47 // pred_fallthru
          _
        // Predicated region
        $region81: #{tpu_custom_call.1} parent=47 // pred_check
          %p1782 = pneg %p315
        $region82: #{tpu_custom_call.1} parent=47 // pred_check_branch
          %1784 = sbr.rel (%p1782) target = $region84
        $region83: #{tpu_custom_call.1} parent=47 // pred_region
          %s1785 = smul.u32 16, %s43
          %s1787 = ssub.s32 4096, 4096
          %1788 = vsyncadd %s1721, %s1787
          %s1789 = smul.addr %s1785, 2
          %s1790 = smul.addr %s42, 64
          %s1791 = sadd.s32 %s1789, %s1790
          %s1792 = smul.addr %s1791, 128
          %s1793 = scalar_lea.hbm %s10, %s1792
          %s1794 = sshll.u32 %s1724, 4
          %s1795 = int_to_ptr.vmem [resolvable:$true] %s1794
          %1800 = dma.vmem_to_hbm [thread:$0]  %s1795, 4096, %s1793, %s1721, 256, 256, 16
        $region84: #{tpu_custom_call.1} parent=47 // pred_fallthru
          _
      $region48: #{tpu_custom_call.1} parent=5 // pred_fallthru
        _
      %p1801 = scmp.le.s32.totalorder 2, %s33
      // Predicated region
      $region85: #{tpu_custom_call.1} parent=5 // pred_check
        %p1802 = pneg %p1801
      $region86: #{tpu_custom_call.1} parent=5 // pred_check_branch
        %1804 = sbr.rel (%p1802) target = $region88
      $region87: #{tpu_custom_call.1} parent=5 // pred_region
        %s1805 = ssub.s32 %s33, 2
        // Predicated region
        $region89: #{tpu_custom_call.1} parent=87 // pred_check
          %p1806 = pneg %p237
        $region90: #{tpu_custom_call.1} parent=87 // pred_check_branch
          %1808 = sbr.rel (%p1806) target = $region92
        $region91: #{tpu_custom_call.1} parent=87 // pred_region
          %s1809 = sand.u32 %s222, 1
          %s1810 = scalar_lea.sflag [#allocation4], %s1809
          %s1811 = sand.u32 %s222, 1
          %s1812 = smul.addr %s1811, 256
          %s1813 = scalar_lea.vmem [#allocation11], %s1812
          %1814 = dma.done %s1810, 4096
        $region92: #{tpu_custom_call.1} parent=87 // pred_fallthru
          _
        // Predicated region
        $region93: #{tpu_custom_call.1} parent=87 // pred_check
          %p1815 = pneg %p265
        $region94: #{tpu_custom_call.1} parent=87 // pred_check_branch
          %1817 = sbr.rel (%p1815) target = $region96
        $region95: #{tpu_custom_call.1} parent=87 // pred_region
          %s1818 = sand.u32 %s39, 1
          %s1819 = scalar_lea.sflag [#allocation13], %s1818
          %s1820 = sand.u32 %s250, 1
          %s1821 = smul.addr %s1820, 256
          %s1822 = scalar_lea.vmem [#allocation12], %s1821
          %1823 = dma.done %s1819, 4096
        $region96: #{tpu_custom_call.1} parent=87 // pred_fallthru
          _
        // Predicated region
        $region97: #{tpu_custom_call.1} parent=87 // pred_check
          %p1824 = pneg %p293
        $region98: #{tpu_custom_call.1} parent=87 // pred_check_branch
          %1826 = sbr.rel (%p1824) target = $region100
        $region99: #{tpu_custom_call.1} parent=87 // pred_region
          %s1827 = sand.u32 %s39, 1
          %s1828 = scalar_lea.sflag [#allocation13], %s1827
          %s1829 = sand.u32 %s278, 1
          %s1830 = smul.addr %s1829, 256
          %s1831 = scalar_lea.vmem [#allocation14], %s1830
          %1832 = dma.done %s1828, 4096
        $region100: #{tpu_custom_call.1} parent=87 // pred_fallthru
          _
        // Predicated region
        $region101: #{tpu_custom_call.1} parent=87 // pred_check
          %p1833 = pneg %p321
        $region102: #{tpu_custom_call.1} parent=87 // pred_check_branch
          %1835 = sbr.rel (%p1833) target = $region104
        $region103: #{tpu_custom_call.1} parent=87 // pred_region
          %s1836 = sand.u32 %s306, 1
          %s1837 = scalar_lea.sflag [#allocation16], %s1836
          %s1838 = sand.u32 %s306, 1
          %s1839 = smul.addr %s1838, 256
          %s1840 = scalar_lea.vmem [#allocation15], %s1839
          %1841 = dma.done %s1837, 4096
        $region104: #{tpu_custom_call.1} parent=87 // pred_fallthru
          _
      $region88: #{tpu_custom_call.1} parent=5 // pred_fallthru
        _
    $region6: #{tpu_custom_call.1} parent=1 // loop_footer
      %s37 = sadd.s32 1, %s33
    $region7: #{tpu_custom_call.1} parent=1 // loop_footer_branch
      %32 = sbr.rel target = $region3
    $region8: #{tpu_custom_call.1} parent=1 // loop_exit
      _
    %1842 = vsyncpa [#allocation3], 1
    %s1843 = scalar_lea.sflag [#allocation3], 1
    %1844 = vsyncpa %s1843, 1
    %1845 = vsyncpa [#allocation6], 1
    %s1846 = scalar_lea.sflag [#allocation6], 1
    %1847 = vsyncpa %s1846, 1
    %1848 = vsyncpa [#allocation9], 1
    %1849 = vsyncpa [#allocation4], 1
    %s1850 = scalar_lea.sflag [#allocation4], 1
    %1851 = vsyncpa %s1850, 1
    %1852 = vsyncpa [#allocation13], 1
    %s1853 = scalar_lea.sflag [#allocation13], 1
    %1854 = vsyncpa %s1853, 1
    %1855 = vsyncpa [#allocation16], 1
    %s1856 = scalar_lea.sflag [#allocation16], 1
    %1857 = vsyncpa %s1856, 1

</llo_original>
